<compile_context>
chip_gen: v5e
topology: v5e:2x2
jax: 0.10.0
libtpu: 0.0.40
codegen_flags: <defaults>
</compile_context>

<pallas_src>
import jax
import jax.numpy as jnp
from jax.experimental import pallas as pl
from jax.experimental.pallas import tpu as pltpu

EPS = 1e-5
K_IN = 784            # 28 * 28
H1 = 256
H2 = 64
H2_PAD = 128          # lane-dense hidden-2 width
N_OUT = 10
N_OUT_PAD = 128       # lane-dense output width
VMEM_HEADROOM = 8 << 20


def _bn_relu(h, gamma, beta, inv_b):
    """Training-mode BatchNorm1d (batch stats, biased var, eps=1e-5) + ReLU, f32.

    One-pass statistics: var = E[h^2] - mean^2, folded into a single per-element
    mul+add (scale = gamma*rsqrt(var+eps), shift = beta - mean*scale).
    Padded columns (all-zero h, gamma=beta=0) come out exactly 0.
    """
    s = jnp.sum(h, axis=0, keepdims=True)
    sq = jnp.sum(h * h, axis=0, keepdims=True)
    mean = s * inv_b
    var = jnp.maximum(sq * inv_b - mean * mean, 0.0)   # clamp tiny negative rounding
    scale = gamma * jax.lax.rsqrt(var + EPS)           # EUP rsqrt: effectively free
    shift = beta - mean * scale
    return jnp.maximum(h * scale + shift, 0.0)


def dnn_kernel(x_ref,                       # (B, 784)  f32 (cast to bf16 in-kernel)
               w1_ref, g1_ref, be1_ref,     # (784, 256) bf16, (1, 256) f32 x2
               w2_ref, g2_ref, be2_ref,     # (256, 128) bf16 (zero-pad N), (1, 128) f32 x2
               w3_ref, b3_ref,              # (128, 128) bf16 (zero-pad K & N), (1, 128) f32
               out_ref):                    # (B, 128)   f32
    inv_b = 1.0 / x_ref.shape[0]            # static

    # layer1: Linear(784->256) (bias cancelled by train-mode BN) + BN + ReLU
    x = x_ref[...].astype(jnp.bfloat16)
    h = jnp.dot(x, w1_ref[...], preferred_element_type=jnp.float32)
    h = _bn_relu(h, g1_ref[...], be1_ref[...], inv_b)              # (B, 256) f32

    # layer2: Linear(256->64), lane-padded to 128 cols (padded cols exactly 0) + BN + ReLU
    h = jnp.dot(h.astype(jnp.bfloat16), w2_ref[...],
                preferred_element_type=jnp.float32)
    h = _bn_relu(h, g2_ref[...], be2_ref[...], inv_b)              # (B, 128) f32

    # layer3: Linear(64->10), K lane-padded to 128 (zero rows), N lane-padded to 128
    out = jnp.dot(h.astype(jnp.bfloat16), w3_ref[...],
                  preferred_element_type=jnp.float32) + b3_ref[...]
    out_ref[...] = out.astype(out_ref.dtype)                       # (B, 128)


def dnn_forward(x_nchw, kparams):
    """x_nchw: (B, 1, 28, 28) float32 -> logits (B, 10) float32."""
    B = x_nchw.shape[0]
    x = x_nchw.reshape(B, K_IN)                      # flatten only; no pad/cast round-trip

    (w1, g1, be1, w2p, g2p, be2p, w3p, b3p) = kparams

    # Footprint of the fused single-block form (input + activations + weights).
    act_bytes = B * (K_IN * 4 + K_IN * 2 + H1 * 4 + H2_PAD * 4 + N_OUT_PAD * 4)
    wgt_bytes = (w1.size + w2p.size + w3p.size) * 2 \
        + (g1.size + be1.size + g2p.size + be2p.size + b3p.size) * 4
    total_bytes = act_bytes + wgt_bytes

    # Generation-aware ceiling: half of the TensorCore's physical VMEM
    # (v5e/v6e 128 MiB -> 64 MiB ceiling, v7x 64 MiB -> 32 MiB ceiling).
    try:
        phys_vmem = int(pltpu.get_tpu_info().vmem_capacity_bytes)
    except Exception:
        phys_vmem = 64 << 20                          # conservative (v7x per-TC)
    ceiling = phys_vmem // 2

    # Guard and requested limit use the SAME bound: anything passing the assert fits
    # the request.  (Gridless single step -> no pipeline buffers to double.)
    assert total_bytes + VMEM_HEADROOM <= ceiling, (
        "batch too large for the fused single-block kernel on this TPU generation; a "
        "two-pass batch-tiled variant is needed because BatchNorm uses full-batch stats")
    vmem_limit = min(ceiling, max(total_bytes + VMEM_HEADROOM, 16 << 20))

    vmem = pl.BlockSpec(memory_space=pltpu.MemorySpace.VMEM)
    out = pl.pallas_call(
        dnn_kernel,
        out_shape=jax.ShapeDtypeStruct((B, N_OUT_PAD), jnp.float32),
        in_specs=[vmem] * 9,
        out_specs=vmem,
        compiler_params=pltpu.CompilerParams(vmem_limit_bytes=int(vmem_limit)),
    )(x, w1, g1, be1, w2p, g2p, be2p, w3p, b3p)
    return out[:, :N_OUT]                             # drop lane padding


def init_params(key):
    """Canonical (PyTorch-equivalent) parameters, all f32, weights stored as (in, out)."""
    ks = jax.random.split(key, 6)
    p = dict(
        w1=jax.random.normal(ks[0], (K_IN, H1), jnp.float32) * 0.02,
        b1=jax.random.normal(ks[1], (1, H1), jnp.float32) * 0.02,
        w2=jax.random.normal(ks[2], (H1, H2), jnp.float32) * 0.02,
        b2=jax.random.normal(ks[3], (1, H2), jnp.float32) * 0.02,
        w3=jax.random.normal(ks[4], (H2, N_OUT), jnp.float32) * 0.02,
        b3=jax.random.normal(ks[5], (1, N_OUT), jnp.float32) * 0.02,
        # BatchNorm affine params (torch default init: gamma=1, beta=0)
        g1=jnp.ones((1, H1), jnp.float32), be1=jnp.zeros((1, H1), jnp.float32),
        g2=jnp.ones((1, H2), jnp.float32), be2=jnp.zeros((1, H2), jnp.float32),
    )
    return p


def prepare_kernel_params(p):
    """One-time weight conversion: bf16 weights, lane-dense hidden-2 and output widths.

    b1/b2 are intentionally NOT passed to the kernel: they are mathematically cancelled
    by the training-mode BatchNorm mean subtraction.  All padding below is with zeros
    and is exact (gamma=beta=0 on padded BN columns -> exact 0 after BN+ReLU; zero w3
    rows -> zero contribution).
    """
    w1 = p["w1"].astype(jnp.bfloat16)                                           # (784, 256)
    w2p = jnp.pad(p["w2"], ((0, 0), (0, H2_PAD - H2))).astype(jnp.bfloat16)     # (256, 128)
    g2p = jnp.pad(p["g2"], ((0, 0), (0, H2_PAD - H2)))                          # (1, 128)
    be2p = jnp.pad(p["be2"], ((0, 0), (0, H2_PAD - H2)))                        # (1, 128)
    w3p = jnp.pad(p["w3"], ((0, H2_PAD - H2), (0, N_OUT_PAD - N_OUT))
                  ).astype(jnp.bfloat16)                                        # (128, 128)
    b3p = jnp.pad(p["b3"], ((0, 0), (0, N_OUT_PAD - N_OUT)))                    # (1, 128) f32
    return (w1, p["g1"], p["be1"], w2p, g2p, be2p, w3p, b3p)


def reference_forward(x_nchw, p, emulate_bf16=False):
    """Pure-JAX reference matching the PyTorch forward (train-mode BN), incl. b1/b2.

    With emulate_bf16=True the matmul operands are rounded to bf16 (f32 accumulation),
    emulating the kernel's MXU precision for a tight comparison.
    """
    x = x_nchw.reshape(x_nchw.shape[0], -1)
    cast = (lambda a: a.astype(jnp.bfloat16)) if emulate_bf16 else (lambda a: a)

    def bn_relu(h, g, be):
        m = jnp.mean(h, axis=0, keepdims=True)
        v = jnp.mean((h - m) ** 2, axis=0, keepdims=True)
        return jnp.maximum((h - m) * jax.lax.rsqrt(v + EPS) * g + be, 0.0)

    h = jnp.dot(cast(x), cast(p["w1"]), preferred_element_type=jnp.float32) + p["b1"]
    h = bn_relu(h, p["g1"], p["be1"])
    h = jnp.dot(cast(h), cast(p["w2"]), preferred_element_type=jnp.float32) + p["b2"]
    h = bn_relu(h, p["g2"], p["be2"])
    return jnp.dot(cast(h), cast(p["w3"]), preferred_element_type=jnp.float32) + p["b3"]


if __name__ == "__main__":
    key = jax.random.PRNGKey(0)
    k_x, k_p = jax.random.split(key)

    # B=128: standard MNIST batch; fills the MXU rows (B=8 is pure launch/DMA overhead).
    B = 128
    x = jax.random.normal(k_x, (B, 1, 28, 28), jnp.float32)
    params = init_params(k_p)
    kparams = prepare_kernel_params(params)

    out = jax.block_until_ready(dnn_forward(x, kparams))
    assert out.shape == (B, N_OUT)

    # Tight check vs. a reference that emulates the kernel's bf16 MXU operands
    # (also applies b1/b2, demonstrating the train-mode-BN bias cancellation, and uses
    # two-pass variance, covering the one-pass rewrite in the kernel).
    ref_bf16 = reference_forward(x, params, emulate_bf16=True)
    assert jnp.allclose(out, ref_bf16, atol=2e-3, rtol=2e-3), "mismatch vs bf16-emulating reference"

    # Looser sanity check vs. the pure-f32 reference; slack covers bf16 operand
    # quantization in the matmuls (accumulation is f32).
    ref_f32 = reference_forward(x, params, emulate_bf16=False)
    assert jnp.allclose(out, ref_f32, atol=5e-2, rtol=5e-2), "mismatch vs f32 reference"

    print("KERNEL_OK")
</pallas_src>

<mosaic_0001>
module attributes {stable_mosaic.version = 11 : i64} {
  func.func @dnn_kernel(%arg0: memref<128x784xf32, #tpu.memory_space<vmem>>, %arg1: memref<784x256xbf16, #tpu.memory_space<vmem>>, %arg2: memref<1x256xf32, #tpu.memory_space<vmem>>, %arg3: memref<1x256xf32, #tpu.memory_space<vmem>>, %arg4: memref<256x128xbf16, #tpu.memory_space<vmem>>, %arg5: memref<1x128xf32, #tpu.memory_space<vmem>>, %arg6: memref<1x128xf32, #tpu.memory_space<vmem>>, %arg7: memref<128x128xbf16, #tpu.memory_space<vmem>>, %arg8: memref<1x128xf32, #tpu.memory_space<vmem>>, %arg9: memref<128x128xf32, #tpu.memory_space<vmem>>) attributes {dimension_semantics = [], scalar_prefetch = 0 : i64, scratch_operands = 0 : i64, tpu.core_type = #tpu.core_type<tc>} {
    %c0 = arith.constant 0 : index
    %c0_0 = arith.constant 0 : index
    %0 = vector.load %arg0[%c0, %c0_0] : memref<128x784xf32, #tpu.memory_space<vmem>>, vector<128x784xf32>
    %1 = arith.truncf %0 : vector<128x784xf32> to vector<128x784xbf16>
    %c0_1 = arith.constant 0 : index
    %c0_2 = arith.constant 0 : index
    %2 = vector.load %arg1[%c0_1, %c0_2] : memref<784x256xbf16, #tpu.memory_space<vmem>>, vector<784x256xbf16>
    %cst = arith.constant dense<0.000000e+00> : vector<128x256xf32>
    %3 = tpu.matmul %1, %2, %cst {dimension_numbers = #tpu.dot_dimension_numbers<[1], [0], [0], [1], [0, 0, 1, 1], [], []>} : vector<128x784xbf16>, vector<784x256xbf16>, vector<128x256xf32> -> vector<128x256xf32>
    %c0_3 = arith.constant 0 : index
    %c0_4 = arith.constant 0 : index
    %4 = vector.load %arg2[%c0_3, %c0_4] : memref<1x256xf32, #tpu.memory_space<vmem>>, vector<1x256xf32>
    %c0_5 = arith.constant 0 : index
    %c0_6 = arith.constant 0 : index
    %5 = vector.load %arg3[%c0_5, %c0_6] : memref<1x256xf32, #tpu.memory_space<vmem>>, vector<1x256xf32>
    %cst_7 = arith.constant dense<0.000000e+00> : vector<256xf32>
    %6 = vector.multi_reduction <add>, %3, %cst_7 [0] : vector<128x256xf32> to vector<256xf32>
    %7 = vector.shape_cast %6 : vector<256xf32> to vector<1x256xf32>
    %8 = arith.mulf %3, %3 : vector<128x256xf32>
    %cst_8 = arith.constant dense<0.000000e+00> : vector<256xf32>
    %9 = vector.multi_reduction <add>, %8, %cst_8 [0] : vector<128x256xf32> to vector<256xf32>
    %10 = vector.shape_cast %9 : vector<256xf32> to vector<1x256xf32>
    %cst_9 = arith.constant 7.812500e-03 : f32
    %11 = vector.broadcast %cst_9 : f32 to vector<1x256xf32>
    %12 = arith.mulf %7, %11 : vector<1x256xf32>
    %cst_10 = arith.constant 7.812500e-03 : f32
    %13 = vector.broadcast %cst_10 : f32 to vector<1x256xf32>
    %14 = arith.mulf %10, %13 : vector<1x256xf32>
    %15 = arith.mulf %12, %12 : vector<1x256xf32>
    %16 = arith.subf %14, %15 : vector<1x256xf32>
    %cst_11 = arith.constant 0.000000e+00 : f32
    %17 = vector.broadcast %cst_11 : f32 to vector<1x256xf32>
    %18 = arith.maximumf %16, %17 : vector<1x256xf32>
    %cst_12 = arith.constant 9.99999974E-6 : f32
    %19 = vector.broadcast %cst_12 : f32 to vector<1x256xf32>
    %20 = arith.addf %18, %19 : vector<1x256xf32>
    %21 = math.rsqrt %20 : vector<1x256xf32>
    %22 = arith.mulf %4, %21 : vector<1x256xf32>
    %23 = arith.mulf %12, %22 : vector<1x256xf32>
    %24 = arith.subf %5, %23 : vector<1x256xf32>
    %25 = vector.broadcast %22 : vector<1x256xf32> to vector<128x256xf32>
    %26 = arith.mulf %3, %25 : vector<128x256xf32>
    %27 = vector.broadcast %24 : vector<1x256xf32> to vector<128x256xf32>
    %28 = arith.addf %26, %27 : vector<128x256xf32>
    %cst_13 = arith.constant 0.000000e+00 : f32
    %29 = vector.broadcast %cst_13 : f32 to vector<128x256xf32>
    %30 = arith.maximumf %28, %29 : vector<128x256xf32>
    %31 = arith.truncf %30 : vector<128x256xf32> to vector<128x256xbf16>
    %c0_14 = arith.constant 0 : index
    %c0_15 = arith.constant 0 : index
    %32 = vector.load %arg4[%c0_14, %c0_15] : memref<256x128xbf16, #tpu.memory_space<vmem>>, vector<256x128xbf16>
    %cst_16 = arith.constant dense<0.000000e+00> : vector<128x128xf32>
    %33 = tpu.matmul %31, %32, %cst_16 {dimension_numbers = #tpu.dot_dimension_numbers<[1], [0], [0], [1], [0, 0, 1, 1], [], []>} : vector<128x256xbf16>, vector<256x128xbf16>, vector<128x128xf32> -> vector<128x128xf32>
    %c0_17 = arith.constant 0 : index
    %c0_18 = arith.constant 0 : index
    %34 = vector.load %arg5[%c0_17, %c0_18] : memref<1x128xf32, #tpu.memory_space<vmem>>, vector<1x128xf32>
    %c0_19 = arith.constant 0 : index
    %c0_20 = arith.constant 0 : index
    %35 = vector.load %arg6[%c0_19, %c0_20] : memref<1x128xf32, #tpu.memory_space<vmem>>, vector<1x128xf32>
    %cst_21 = arith.constant dense<0.000000e+00> : vector<128xf32>
    %36 = vector.multi_reduction <add>, %33, %cst_21 [0] : vector<128x128xf32> to vector<128xf32>
    %37 = vector.shape_cast %36 : vector<128xf32> to vector<1x128xf32>
    %38 = arith.mulf %33, %33 : vector<128x128xf32>
    %cst_22 = arith.constant dense<0.000000e+00> : vector<128xf32>
    %39 = vector.multi_reduction <add>, %38, %cst_22 [0] : vector<128x128xf32> to vector<128xf32>
    %40 = vector.shape_cast %39 : vector<128xf32> to vector<1x128xf32>
    %cst_23 = arith.constant 7.812500e-03 : f32
    %41 = vector.broadcast %cst_23 : f32 to vector<1x128xf32>
    %42 = arith.mulf %37, %41 : vector<1x128xf32>
    %cst_24 = arith.constant 7.812500e-03 : f32
    %43 = vector.broadcast %cst_24 : f32 to vector<1x128xf32>
    %44 = arith.mulf %40, %43 : vector<1x128xf32>
    %45 = arith.mulf %42, %42 : vector<1x128xf32>
    %46 = arith.subf %44, %45 : vector<1x128xf32>
    %cst_25 = arith.constant 0.000000e+00 : f32
    %47 = vector.broadcast %cst_25 : f32 to vector<1x128xf32>
    %48 = arith.maximumf %46, %47 : vector<1x128xf32>
    %cst_26 = arith.constant 9.99999974E-6 : f32
    %49 = vector.broadcast %cst_26 : f32 to vector<1x128xf32>
    %50 = arith.addf %48, %49 : vector<1x128xf32>
    %51 = math.rsqrt %50 : vector<1x128xf32>
    %52 = arith.mulf %34, %51 : vector<1x128xf32>
    %53 = arith.mulf %42, %52 : vector<1x128xf32>
    %54 = arith.subf %35, %53 : vector<1x128xf32>
    %55 = vector.broadcast %52 : vector<1x128xf32> to vector<128x128xf32>
    %56 = arith.mulf %33, %55 : vector<128x128xf32>
    %57 = vector.broadcast %54 : vector<1x128xf32> to vector<128x128xf32>
    %58 = arith.addf %56, %57 : vector<128x128xf32>
    %cst_27 = arith.constant 0.000000e+00 : f32
    %59 = vector.broadcast %cst_27 : f32 to vector<128x128xf32>
    %60 = arith.maximumf %58, %59 : vector<128x128xf32>
    %61 = arith.truncf %60 : vector<128x128xf32> to vector<128x128xbf16>
    %c0_28 = arith.constant 0 : index
    %c0_29 = arith.constant 0 : index
    %62 = vector.load %arg7[%c0_28, %c0_29] : memref<128x128xbf16, #tpu.memory_space<vmem>>, vector<128x128xbf16>
    %cst_30 = arith.constant dense<0.000000e+00> : vector<128x128xf32>
    %63 = tpu.matmul %61, %62, %cst_30 {dimension_numbers = #tpu.dot_dimension_numbers<[1], [0], [0], [1], [0, 0, 1, 1], [], []>} : vector<128x128xbf16>, vector<128x128xbf16>, vector<128x128xf32> -> vector<128x128xf32>
    %c0_31 = arith.constant 0 : index
    %c0_32 = arith.constant 0 : index
    %64 = vector.load %arg8[%c0_31, %c0_32] : memref<1x128xf32, #tpu.memory_space<vmem>>, vector<1x128xf32>
    %65 = vector.broadcast %64 : vector<1x128xf32> to vector<128x128xf32>
    %66 = arith.addf %63, %65 : vector<128x128xf32>
    %c0_33 = arith.constant 0 : index
    %c0_34 = arith.constant 0 : index
    %67 = vector.load %arg9[%c0_33, %c0_34] : memref<128x128xf32, #tpu.memory_space<vmem>>, vector<128x128xf32>
    tpu.vector_store %arg9[%c0_33, %c0_34], %66 {strides = array<i32>} : memref<128x128xf32, #tpu.memory_space<vmem>>, vector<128x128xf32>,
    return
  }
}

</mosaic_0001>

<llo_original>
// kernel: tpu_custom_call.1
$region0: #{tpu_custom_call.1}
  #allocation0 [shape = 'u32[]', space=smem, size = 0x4, offset = 0x4, fixed_abs, tag = 'smem constant byte address 0x4 - core index']
  #allocation1 [shape = 'u32[72,128]{1,0:T(1,128)}', space=vmem, size = 0x9000, scoped, tag = 'internal scratch']
  %s0 = inlined_call_operand.vmem [shape: f32[128,784], index: 0, kind: input, shape index: {}]
  %s1 = inlined_call_operand.vmem [shape: bf16[784,256], index: 1, kind: input, shape index: {}]
  %s2 = inlined_call_operand.vmem [shape: f32[1,256], index: 2, kind: input, shape index: {}]
  %s3 = inlined_call_operand.vmem [shape: f32[1,256], index: 3, kind: input, shape index: {}]
  %s4 = inlined_call_operand.vmem [shape: bf16[256,128], index: 4, kind: input, shape index: {}]
  %s5 = inlined_call_operand.vmem [shape: f32[1,128], index: 5, kind: input, shape index: {}]
  %s6 = inlined_call_operand.vmem [shape: f32[1,128], index: 6, kind: input, shape index: {}]
  %s7 = inlined_call_operand.vmem [shape: bf16[128,128], index: 7, kind: input, shape index: {}]
  %s8 = inlined_call_operand.vmem [shape: f32[1,128], index: 8, kind: input, shape index: {}]
  %s9 = inlined_call_operand.hbm [shape: f32[128,128], index: 9, kind: output, shape index: {}]
  %s10 = sld [smem:[#allocation0]]
  $region46: #{tpu_custom_call.1} parent=0
    _
  %s12 = ssub.s32 1, %s10
  %s13 = scalar_select 0, %s12, %s10
  $region1: #{tpu_custom_call.1} parent=0
    #allocation2 [shape = 'u8[65536]{0}', space=vmem, size = 0x10000, scoped, tag = 'output window, operand 0, single buffered']
    #allocation3 [shape = 's32[1]{0}', space=sflag, size = 0x4, scoped, tag = 'scoped memory for tpu_custom_call.1']
    %14 = vsyncpa [#allocation3], 0
    // Predicated region
    $region2: #{tpu_custom_call.1} parent=1 // pred_check
      _
    $region3: #{tpu_custom_call.1} parent=1 // pred_check_branch
      %16 = sbr.rel (0) target = $region5
    $region4: #{tpu_custom_call.1} parent=1 // pred_region
      _
    $region5: #{tpu_custom_call.1} parent=1 // pred_fallthru
      _
    // Predicated region
    $region6: #{tpu_custom_call.1} parent=1 // pred_check
      _
    $region7: #{tpu_custom_call.1} parent=1 // pred_check_branch
      %18 = sbr.rel (0) target = $region9
    $region8: #{tpu_custom_call.1} parent=1 // pred_region
      _
    $region9: #{tpu_custom_call.1} parent=1 // pred_fallthru
      _
    // Predicated region
    $region10: #{tpu_custom_call.1} parent=1 // pred_check
      _
    $region11: #{tpu_custom_call.1} parent=1 // pred_check_branch
      %20 = sbr.rel (0) target = $region13
    $region12: #{tpu_custom_call.1} parent=1 // pred_region
      _
    $region13: #{tpu_custom_call.1} parent=1 // pred_fallthru
      _
    // Predicated region
    $region14: #{tpu_custom_call.1} parent=1 // pred_check
      _
    $region15: #{tpu_custom_call.1} parent=1 // pred_check_branch
      %22 = sbr.rel (0) target = $region17
    $region16: #{tpu_custom_call.1} parent=1 // pred_region
      _
    $region17: #{tpu_custom_call.1} parent=1 // pred_fallthru
      _
    // Predicated region
    $region18: #{tpu_custom_call.1} parent=1 // pred_check
      _
    $region19: #{tpu_custom_call.1} parent=1 // pred_check_branch
      %24 = sbr.rel (0) target = $region21
    $region20: #{tpu_custom_call.1} parent=1 // pred_region
      _
    $region21: #{tpu_custom_call.1} parent=1 // pred_fallthru
      _
    // Predicated region
    $region22: #{tpu_custom_call.1} parent=1 // pred_check
      _
    $region23: #{tpu_custom_call.1} parent=1 // pred_check_branch
      %26 = sbr.rel (0) target = $region25
    $region24: #{tpu_custom_call.1} parent=1 // pred_region
      _
    $region25: #{tpu_custom_call.1} parent=1 // pred_fallthru
      _
    // Predicated region
    $region26: #{tpu_custom_call.1} parent=1 // pred_check
      _
    $region27: #{tpu_custom_call.1} parent=1 // pred_check_branch
      %28 = sbr.rel (0) target = $region29
    $region28: #{tpu_custom_call.1} parent=1 // pred_region
      _
    $region29: #{tpu_custom_call.1} parent=1 // pred_fallthru
      _
    // Predicated region
    $region30: #{tpu_custom_call.1} parent=1 // pred_check
      _
    $region31: #{tpu_custom_call.1} parent=1 // pred_check_branch
      %30 = sbr.rel (0) target = $region33
    $region32: #{tpu_custom_call.1} parent=1 // pred_region
      _
    $region33: #{tpu_custom_call.1} parent=1 // pred_fallthru
      _
    // Predicated region
    $region34: #{tpu_custom_call.1} parent=1 // pred_check
      _
    $region35: #{tpu_custom_call.1} parent=1 // pred_check_branch
      %32 = sbr.rel (0) target = $region37
    $region36: #{tpu_custom_call.1} parent=1 // pred_region
      _
    $region37: #{tpu_custom_call.1} parent=1 // pred_fallthru
      _
    %v34 = vld [vmem:[%s0] sm:$0xff]
    %v35 = vld [vmem:[%s0 + $0x8] sm:$0xff]
    %v36 = vld [vmem:[%s0 + $0x10] sm:$0xff]
    %v37 = vld [vmem:[%s0 + $0x18] sm:$0xff]
    %v38 = vld [vmem:[%s0 + $0x20] sm:$0xff]
    %v39 = vld [vmem:[%s0 + $0x28] sm:$0xff]
    %v40 = vld [vmem:[%s0 + $0x30] sm:$0xff]
    %v41 = vld [vmem:[%s0 + $0x38] sm:$0xff]
    %v42 = vld [vmem:[%s0 + $0x40] sm:$0xff]
    %v43 = vld [vmem:[%s0 + $0x48] sm:$0xff]
    %v44 = vld [vmem:[%s0 + $0x50] sm:$0xff]
    %v45 = vld [vmem:[%s0 + $0x58] sm:$0xff]
    %v46 = vld [vmem:[%s0 + $0x60] sm:$0xff]
    %v47 = vld [vmem:[%s0 + $0x68] sm:$0xff]
    %v48 = vld [vmem:[%s0 + $0x70] sm:$0xff]
    %v49 = vld [vmem:[%s0 + $0x78] sm:$0xff]
    %v50 = vld [vmem:[%s0 + $0x80] sm:$0xff]
    %v51 = vld [vmem:[%s0 + $0x88] sm:$0xff]
    %v52 = vld [vmem:[%s0 + $0x90] sm:$0xff]
    %v53 = vld [vmem:[%s0 + $0x98] sm:$0xff]
    %v54 = vld [vmem:[%s0 + $0xa0] sm:$0xff]
    %v55 = vld [vmem:[%s0 + $0xa8] sm:$0xff]
    %v56 = vld [vmem:[%s0 + $0xb0] sm:$0xff]
    %v57 = vld [vmem:[%s0 + $0xb8] sm:$0xff]
    %v58 = vld [vmem:[%s0 + $0xc0] sm:$0xff]
    %v59 = vld [vmem:[%s0 + $0xc8] sm:$0xff]
    %v60 = vld [vmem:[%s0 + $0xd0] sm:$0xff]
    %v61 = vld [vmem:[%s0 + $0xd8] sm:$0xff]
    %v62 = vld [vmem:[%s0 + $0xe0] sm:$0xff]
    %v63 = vld [vmem:[%s0 + $0xe8] sm:$0xff]
    %v64 = vld [vmem:[%s0 + $0xf0] sm:$0xff]
    %v65 = vld [vmem:[%s0 + $0xf8] sm:$0xff]
    %v66 = vld [vmem:[%s0 + $0x100] sm:$0xff]
    %v67 = vld [vmem:[%s0 + $0x108] sm:$0xff]
    %v68 = vld [vmem:[%s0 + $0x110] sm:$0xff]
    %v69 = vld [vmem:[%s0 + $0x118] sm:$0xff]
    %v70 = vld [vmem:[%s0 + $0x120] sm:$0xff]
    %v71 = vld [vmem:[%s0 + $0x128] sm:$0xff]
    %v72 = vld [vmem:[%s0 + $0x130] sm:$0xff]
    %v73 = vld [vmem:[%s0 + $0x138] sm:$0xff]
    %v74 = vld [vmem:[%s0 + $0x140] sm:$0xff]
    %v75 = vld [vmem:[%s0 + $0x148] sm:$0xff]
    %v76 = vld [vmem:[%s0 + $0x150] sm:$0xff]
    %v77 = vld [vmem:[%s0 + $0x158] sm:$0xff]
    %v78 = vld [vmem:[%s0 + $0x160] sm:$0xff]
    %v79 = vld [vmem:[%s0 + $0x168] sm:$0xff]
    %v80 = vld [vmem:[%s0 + $0x170] sm:$0xff]
    %v81 = vld [vmem:[%s0 + $0x178] sm:$0xff]
    %v82 = vld [vmem:[%s0 + $0x180] sm:$0xff]
    %v83 = vld [vmem:[%s0 + $0x188] sm:$0xff]
    %v84 = vld [vmem:[%s0 + $0x190] sm:$0xff]
    %v85 = vld [vmem:[%s0 + $0x198] sm:$0xff]
    %v86 = vld [vmem:[%s0 + $0x1a0] sm:$0xff]
    %v87 = vld [vmem:[%s0 + $0x1a8] sm:$0xff]
    %v88 = vld [vmem:[%s0 + $0x1b0] sm:$0xff]
    %v89 = vld [vmem:[%s0 + $0x1b8] sm:$0xff]
    %v90 = vld [vmem:[%s0 + $0x1c0] sm:$0xff]
    %v91 = vld [vmem:[%s0 + $0x1c8] sm:$0xff]
    %v92 = vld [vmem:[%s0 + $0x1d0] sm:$0xff]
    %v93 = vld [vmem:[%s0 + $0x1d8] sm:$0xff]
    %v94 = vld [vmem:[%s0 + $0x1e0] sm:$0xff]
    %v95 = vld [vmem:[%s0 + $0x1e8] sm:$0xff]
    %v96 = vld [vmem:[%s0 + $0x1f0] sm:$0xff]
    %v97 = vld [vmem:[%s0 + $0x1f8] sm:$0xff]
    %v98 = vld [vmem:[%s0 + $0x200] sm:$0xff]
    %v99 = vld [vmem:[%s0 + $0x208] sm:$0xff]
    %v100 = vld [vmem:[%s0 + $0x210] sm:$0xff]
    %v101 = vld [vmem:[%s0 + $0x218] sm:$0xff]
    %v102 = vld [vmem:[%s0 + $0x220] sm:$0xff]
    %v103 = vld [vmem:[%s0 + $0x228] sm:$0xff]
    %v104 = vld [vmem:[%s0 + $0x230] sm:$0xff]
    %v105 = vld [vmem:[%s0 + $0x238] sm:$0xff]
    %v106 = vld [vmem:[%s0 + $0x240] sm:$0xff]
    %v107 = vld [vmem:[%s0 + $0x248] sm:$0xff]
    %v108 = vld [vmem:[%s0 + $0x250] sm:$0xff]
    %v109 = vld [vmem:[%s0 + $0x258] sm:$0xff]
    %v110 = vld [vmem:[%s0 + $0x260] sm:$0xff]
    %v111 = vld [vmem:[%s0 + $0x268] sm:$0xff]
    %v112 = vld [vmem:[%s0 + $0x270] sm:$0xff]
    %v113 = vld [vmem:[%s0 + $0x278] sm:$0xff]
    %v114 = vld [vmem:[%s0 + $0x280] sm:$0xff]
    %v115 = vld [vmem:[%s0 + $0x288] sm:$0xff]
    %v116 = vld [vmem:[%s0 + $0x290] sm:$0xff]
    %v117 = vld [vmem:[%s0 + $0x298] sm:$0xff]
    %v118 = vld [vmem:[%s0 + $0x2a0] sm:$0xff]
    %v119 = vld [vmem:[%s0 + $0x2a8] sm:$0xff]
    %v120 = vld [vmem:[%s0 + $0x2b0] sm:$0xff]
    %v121 = vld [vmem:[%s0 + $0x2b8] sm:$0xff]
    %v122 = vld [vmem:[%s0 + $0x2c0] sm:$0xff]
    %v123 = vld [vmem:[%s0 + $0x2c8] sm:$0xff]
    %v124 = vld [vmem:[%s0 + $0x2d0] sm:$0xff]
    %v125 = vld [vmem:[%s0 + $0x2d8] sm:$0xff]
    %v126 = vld [vmem:[%s0 + $0x2e0] sm:$0xff]
    %v127 = vld [vmem:[%s0 + $0x2e8] sm:$0xff]
    %v128 = vld [vmem:[%s0 + $0x2f0] sm:$0xff]
    %v129 = vld [vmem:[%s0 + $0x2f8] sm:$0xff]
    %v130 = vld [vmem:[%s0 + $0x300] sm:$0xff]
    %v131 = vld [vmem:[%s0 + $0x308] sm:$0xff]
    %v132 = vld [vmem:[%s0 + $0x310] sm:$0xff]
    %v133 = vld [vmem:[%s0 + $0x318] sm:$0xff]
    %v134 = vld [vmem:[%s0 + $0x320] sm:$0xff]
    %v135 = vld [vmem:[%s0 + $0x328] sm:$0xff]
    %v136 = vld [vmem:[%s0 + $0x330] sm:$0xff]
    %v137 = vld [vmem:[%s0 + $0x338] sm:$0xff]
    %v138 = vld [vmem:[%s0 + $0x340] sm:$0xff]
    %v139 = vld [vmem:[%s0 + $0x348] sm:$0xff]
    %v140 = vld [vmem:[%s0 + $0x350] sm:$0xff]
    %v141 = vld [vmem:[%s0 + $0x358] sm:$0xff]
    %v142 = vld [vmem:[%s0 + $0x360] sm:$0xff]
    %v143 = vld [vmem:[%s0 + $0x368] sm:$0xff]
    %v144 = vld [vmem:[%s0 + $0x370] sm:$0xff]
    %v145 = vld [vmem:[%s0 + $0x378] sm:$0xff]
    %v146 = vpack.c.bf16 %v41, %v34
    %v147 = vpack.c.bf16 %v42, %v35
    %v148 = vpack.c.bf16 %v43, %v36
    %v149 = vpack.c.bf16 %v44, %v37
    %v150 = vpack.c.bf16 %v45, %v38
    %v151 = vpack.c.bf16 %v46, %v39
    %v152 = vpack.c.bf16 %v47, %v40
    %v153 = vpack.c.bf16 %v55, %v48
    %v154 = vpack.c.bf16 %v56, %v49
    %v155 = vpack.c.bf16 %v57, %v50
    %v156 = vpack.c.bf16 %v58, %v51
    %v157 = vpack.c.bf16 %v59, %v52
    %v158 = vpack.c.bf16 %v60, %v53
    %v159 = vpack.c.bf16 %v61, %v54
    %v160 = vpack.c.bf16 %v69, %v62
    %v161 = vpack.c.bf16 %v70, %v63
    %v162 = vpack.c.bf16 %v71, %v64
    %v163 = vpack.c.bf16 %v72, %v65
    %v164 = vpack.c.bf16 %v73, %v66
    %v165 = vpack.c.bf16 %v74, %v67
    %v166 = vpack.c.bf16 %v75, %v68
    %v167 = vpack.c.bf16 %v83, %v76
    %v168 = vpack.c.bf16 %v84, %v77
    %v169 = vpack.c.bf16 %v85, %v78
    %v170 = vpack.c.bf16 %v86, %v79
    %v171 = vpack.c.bf16 %v87, %v80
    %v172 = vpack.c.bf16 %v88, %v81
    %v173 = vpack.c.bf16 %v89, %v82
    %v174 = vpack.c.bf16 %v97, %v90
    %v175 = vpack.c.bf16 %v98, %v91
    %v176 = vpack.c.bf16 %v99, %v92
    %v177 = vpack.c.bf16 %v100, %v93
    %v178 = vpack.c.bf16 %v101, %v94
    %v179 = vpack.c.bf16 %v102, %v95
    %v180 = vpack.c.bf16 %v103, %v96
    %v181 = vpack.c.bf16 %v111, %v104
    %v182 = vpack.c.bf16 %v112, %v105
    %v183 = vpack.c.bf16 %v113, %v106
    %v184 = vpack.c.bf16 %v114, %v107
    %v185 = vpack.c.bf16 %v115, %v108
    %v186 = vpack.c.bf16 %v116, %v109
    %v187 = vpack.c.bf16 %v117, %v110
    %v188 = vpack.c.bf16 %v125, %v118
    %v189 = vpack.c.bf16 %v126, %v119
    %v190 = vpack.c.bf16 %v127, %v120
    %v191 = vpack.c.bf16 %v128, %v121
    %v192 = vpack.c.bf16 %v129, %v122
    %v193 = vpack.c.bf16 %v130, %v123
    %v194 = vpack.c.bf16 %v131, %v124
    %v195 = vpack.c.bf16 %v139, %v132
    %v196 = vpack.c.bf16 %v140, %v133
    %v197 = vpack.c.bf16 %v141, %v134
    %v198 = vpack.c.bf16 %v142, %v135
    %v199 = vpack.c.bf16 %v143, %v136
    %v200 = vpack.c.bf16 %v144, %v137
    %v201 = vpack.c.bf16 %v145, %v138
    %v202 = vld [vmem:[%s1] sm:$0xff]
    %v203 = vld [vmem:[%s1 + $0x8] sm:$0xff]
    %v204 = vld [vmem:[%s1 + $0x10] sm:$0xff]
    %v205 = vld [vmem:[%s1 + $0x18] sm:$0xff]
    %v206 = vld [vmem:[%s1 + $0x20] sm:$0xff]
    %v207 = vld [vmem:[%s1 + $0x28] sm:$0xff]
    %v208 = vld [vmem:[%s1 + $0x30] sm:$0xff]
    %v209 = vld [vmem:[%s1 + $0x38] sm:$0xff]
    %v210 = vld [vmem:[%s1 + $0x40] sm:$0xff]
    %v211 = vld [vmem:[%s1 + $0x48] sm:$0xff]
    %v212 = vld [vmem:[%s1 + $0x50] sm:$0xff]
    %v213 = vld [vmem:[%s1 + $0x58] sm:$0xff]
    %v214 = vld [vmem:[%s1 + $0x60] sm:$0xff]
    %v215 = vld [vmem:[%s1 + $0x68] sm:$0xff]
    %v216 = vld [vmem:[%s1 + $0x70] sm:$0xff]
    %v217 = vld [vmem:[%s1 + $0x78] sm:$0xff]
    %v218 = vld [vmem:[%s1 + $0x80] sm:$0xff]
    %v219 = vld [vmem:[%s1 + $0x88] sm:$0xff]
    %v220 = vld [vmem:[%s1 + $0x90] sm:$0xff]
    %v221 = vld [vmem:[%s1 + $0x98] sm:$0xff]
    %v222 = vld [vmem:[%s1 + $0xa0] sm:$0xff]
    %v223 = vld [vmem:[%s1 + $0xa8] sm:$0xff]
    %v224 = vld [vmem:[%s1 + $0xb0] sm:$0xff]
    %v225 = vld [vmem:[%s1 + $0xb8] sm:$0xff]
    %v226 = vld [vmem:[%s1 + $0xc0] sm:$0xff]
    %v227 = vld [vmem:[%s1 + $0xc8] sm:$0xff]
    %v228 = vld [vmem:[%s1 + $0xd0] sm:$0xff]
    %v229 = vld [vmem:[%s1 + $0xd8] sm:$0xff]
    %v230 = vld [vmem:[%s1 + $0xe0] sm:$0xff]
    %v231 = vld [vmem:[%s1 + $0xe8] sm:$0xff]
    %v232 = vld [vmem:[%s1 + $0xf0] sm:$0xff]
    %v233 = vld [vmem:[%s1 + $0xf8] sm:$0xff]
    %v234 = vld [vmem:[%s1 + $0x100] sm:$0xff]
    %v235 = vld [vmem:[%s1 + $0x108] sm:$0xff]
    %v236 = vld [vmem:[%s1 + $0x110] sm:$0xff]
    %v237 = vld [vmem:[%s1 + $0x118] sm:$0xff]
    %v238 = vld [vmem:[%s1 + $0x120] sm:$0xff]
    %v239 = vld [vmem:[%s1 + $0x128] sm:$0xff]
    %v240 = vld [vmem:[%s1 + $0x130] sm:$0xff]
    %v241 = vld [vmem:[%s1 + $0x138] sm:$0xff]
    %v242 = vld [vmem:[%s1 + $0x140] sm:$0xff]
    %v243 = vld [vmem:[%s1 + $0x148] sm:$0xff]
    %v244 = vld [vmem:[%s1 + $0x150] sm:$0xff]
    %v245 = vld [vmem:[%s1 + $0x158] sm:$0xff]
    %v246 = vld [vmem:[%s1 + $0x160] sm:$0xff]
    %v247 = vld [vmem:[%s1 + $0x168] sm:$0xff]
    %v248 = vld [vmem:[%s1 + $0x170] sm:$0xff]
    %v249 = vld [vmem:[%s1 + $0x178] sm:$0xff]
    %v250 = vld [vmem:[%s1 + $0x180] sm:$0xff]
    %v251 = vld [vmem:[%s1 + $0x188] sm:$0xff]
    %v252 = vld [vmem:[%s1 + $0x190] sm:$0xff]
    %v253 = vld [vmem:[%s1 + $0x198] sm:$0xff]
    %v254 = vld [vmem:[%s1 + $0x1a0] sm:$0xff]
    %v255 = vld [vmem:[%s1 + $0x1a8] sm:$0xff]
    %v256 = vld [vmem:[%s1 + $0x1b0] sm:$0xff]
    %v257 = vld [vmem:[%s1 + $0x1b8] sm:$0xff]
    %v258 = vld [vmem:[%s1 + $0x1c0] sm:$0xff]
    %v259 = vld [vmem:[%s1 + $0x1c8] sm:$0xff]
    %v260 = vld [vmem:[%s1 + $0x1d0] sm:$0xff]
    %v261 = vld [vmem:[%s1 + $0x1d8] sm:$0xff]
    %v262 = vld [vmem:[%s1 + $0x1e0] sm:$0xff]
    %v263 = vld [vmem:[%s1 + $0x1e8] sm:$0xff]
    %v264 = vld [vmem:[%s1 + $0x1f0] sm:$0xff]
    %v265 = vld [vmem:[%s1 + $0x1f8] sm:$0xff]
    %v266 = vld [vmem:[%s1 + $0x200] sm:$0xff]
    %v267 = vld [vmem:[%s1 + $0x208] sm:$0xff]
    %v268 = vld [vmem:[%s1 + $0x210] sm:$0xff]
    %v269 = vld [vmem:[%s1 + $0x218] sm:$0xff]
    %v270 = vld [vmem:[%s1 + $0x220] sm:$0xff]
    %v271 = vld [vmem:[%s1 + $0x228] sm:$0xff]
    %v272 = vld [vmem:[%s1 + $0x230] sm:$0xff]
    %v273 = vld [vmem:[%s1 + $0x238] sm:$0xff]
    %v274 = vld [vmem:[%s1 + $0x240] sm:$0xff]
    %v275 = vld [vmem:[%s1 + $0x248] sm:$0xff]
    %v276 = vld [vmem:[%s1 + $0x250] sm:$0xff]
    %v277 = vld [vmem:[%s1 + $0x258] sm:$0xff]
    %v278 = vld [vmem:[%s1 + $0x260] sm:$0xff]
    %v279 = vld [vmem:[%s1 + $0x268] sm:$0xff]
    %v280 = vld [vmem:[%s1 + $0x270] sm:$0xff]
    %v281 = vld [vmem:[%s1 + $0x278] sm:$0xff]
    %v282 = vld [vmem:[%s1 + $0x280] sm:$0xff]
    %v283 = vld [vmem:[%s1 + $0x288] sm:$0xff]
    %v284 = vld [vmem:[%s1 + $0x290] sm:$0xff]
    %v285 = vld [vmem:[%s1 + $0x298] sm:$0xff]
    %v286 = vld [vmem:[%s1 + $0x2a0] sm:$0xff]
    %v287 = vld [vmem:[%s1 + $0x2a8] sm:$0xff]
    %v288 = vld [vmem:[%s1 + $0x2b0] sm:$0xff]
    %v289 = vld [vmem:[%s1 + $0x2b8] sm:$0xff]
    %v290 = vld [vmem:[%s1 + $0x2c0] sm:$0xff]
    %v291 = vld [vmem:[%s1 + $0x2c8] sm:$0xff]
    %v292 = vld [vmem:[%s1 + $0x2d0] sm:$0xff]
    %v293 = vld [vmem:[%s1 + $0x2d8] sm:$0xff]
    %v294 = vld [vmem:[%s1 + $0x2e0] sm:$0xff]
    %v295 = vld [vmem:[%s1 + $0x2e8] sm:$0xff]
    %v296 = vld [vmem:[%s1 + $0x2f0] sm:$0xff]
    %v297 = vld [vmem:[%s1 + $0x2f8] sm:$0xff]
    %v298 = vld [vmem:[%s1 + $0x300] sm:$0xff]
    %v299 = vld [vmem:[%s1 + $0x308] sm:$0xff]
    %v398 = vunpack.c.l.b16 %v202
    %v399 = vunpack.c.h.b16 %v202
    %v400 = vunpack.c.l.b16 %v203
    %v401 = vunpack.c.h.b16 %v203
    %v402 = vunpack.c.l.b16 %v204
    %v403 = vunpack.c.h.b16 %v204
    %v404 = vunpack.c.l.b16 %v205
    %v405 = vunpack.c.h.b16 %v205
    %v406 = vunpack.c.l.b16 %v206
    %v407 = vunpack.c.h.b16 %v206
    %v408 = vunpack.c.l.b16 %v207
    %v409 = vunpack.c.h.b16 %v207
    %v410 = vunpack.c.l.b16 %v208
    %v411 = vunpack.c.h.b16 %v208
    %v412 = vunpack.c.l.b16 %v209
    %v413 = vunpack.c.h.b16 %v209
    %v414 = vunpack.c.l.b16 %v210
    %v415 = vunpack.c.h.b16 %v210
    %v416 = vunpack.c.l.b16 %v211
    %v417 = vunpack.c.h.b16 %v211
    %v418 = vunpack.c.l.b16 %v212
    %v419 = vunpack.c.h.b16 %v212
    %v420 = vunpack.c.l.b16 %v213
    %v421 = vunpack.c.h.b16 %v213
    %v422 = vunpack.c.l.b16 %v214
    %v423 = vunpack.c.h.b16 %v214
    %v424 = vunpack.c.l.b16 %v215
    %v425 = vunpack.c.h.b16 %v215
    %v426 = vunpack.c.l.b16 %v216
    %v427 = vunpack.c.h.b16 %v216
    %v428 = vunpack.c.l.b16 %v217
    %v429 = vunpack.c.h.b16 %v217
    %v430 = vunpack.c.l.b16 %v218
    %v431 = vunpack.c.h.b16 %v218
    %v432 = vunpack.c.l.b16 %v219
    %v433 = vunpack.c.h.b16 %v219
    %v434 = vunpack.c.l.b16 %v220
    %v435 = vunpack.c.h.b16 %v220
    %v436 = vunpack.c.l.b16 %v221
    %v437 = vunpack.c.h.b16 %v221
    %v438 = vunpack.c.l.b16 %v222
    %v439 = vunpack.c.h.b16 %v222
    %v440 = vunpack.c.l.b16 %v223
    %v441 = vunpack.c.h.b16 %v223
    %v442 = vunpack.c.l.b16 %v224
    %v443 = vunpack.c.h.b16 %v224
    %v444 = vunpack.c.l.b16 %v225
    %v445 = vunpack.c.h.b16 %v225
    %v446 = vunpack.c.l.b16 %v226
    %v447 = vunpack.c.h.b16 %v226
    %v448 = vunpack.c.l.b16 %v227
    %v449 = vunpack.c.h.b16 %v227
    %v450 = vunpack.c.l.b16 %v228
    %v451 = vunpack.c.h.b16 %v228
    %v452 = vunpack.c.l.b16 %v229
    %v453 = vunpack.c.h.b16 %v229
    %v454 = vunpack.c.l.b16 %v230
    %v455 = vunpack.c.h.b16 %v230
    %v456 = vunpack.c.l.b16 %v231
    %v457 = vunpack.c.h.b16 %v231
    %v458 = vunpack.c.l.b16 %v232
    %v459 = vunpack.c.h.b16 %v232
    %v460 = vunpack.c.l.b16 %v233
    %v461 = vunpack.c.h.b16 %v233
    %v462 = vunpack.c.l.b16 %v234
    %v463 = vunpack.c.h.b16 %v234
    %v464 = vunpack.c.l.b16 %v235
    %v465 = vunpack.c.h.b16 %v235
    %v466 = vunpack.c.l.b16 %v236
    %v467 = vunpack.c.h.b16 %v236
    %v468 = vunpack.c.l.b16 %v237
    %v469 = vunpack.c.h.b16 %v237
    %v470 = vunpack.c.l.b16 %v238
    %v471 = vunpack.c.h.b16 %v238
    %v472 = vunpack.c.l.b16 %v239
    %v473 = vunpack.c.h.b16 %v239
    %v474 = vunpack.c.l.b16 %v240
    %v475 = vunpack.c.h.b16 %v240
    %v476 = vunpack.c.l.b16 %v241
    %v477 = vunpack.c.h.b16 %v241
    %v478 = vunpack.c.l.b16 %v242
    %v479 = vunpack.c.h.b16 %v242
    %v480 = vunpack.c.l.b16 %v243
    %v481 = vunpack.c.h.b16 %v243
    %v482 = vunpack.c.l.b16 %v244
    %v483 = vunpack.c.h.b16 %v244
    %v484 = vunpack.c.l.b16 %v245
    %v485 = vunpack.c.h.b16 %v245
    %v486 = vunpack.c.l.b16 %v246
    %v487 = vunpack.c.h.b16 %v246
    %v488 = vunpack.c.l.b16 %v247
    %v489 = vunpack.c.h.b16 %v247
    %v490 = vunpack.c.l.b16 %v248
    %v491 = vunpack.c.h.b16 %v248
    %v492 = vunpack.c.l.b16 %v249
    %v493 = vunpack.c.h.b16 %v249
    %v494 = vunpack.c.l.b16 %v250
    %v495 = vunpack.c.h.b16 %v250
    %v496 = vunpack.c.l.b16 %v251
    %v497 = vunpack.c.h.b16 %v251
    %v498 = vunpack.c.l.b16 %v252
    %v499 = vunpack.c.h.b16 %v252
    %v500 = vunpack.c.l.b16 %v253
    %v501 = vunpack.c.h.b16 %v253
    %v502 = vunpack.c.l.b16 %v254
    %v503 = vunpack.c.h.b16 %v254
    %v504 = vunpack.c.l.b16 %v255
    %v505 = vunpack.c.h.b16 %v255
    %v506 = vunpack.c.l.b16 %v256
    %v507 = vunpack.c.h.b16 %v256
    %v508 = vunpack.c.l.b16 %v257
    %v509 = vunpack.c.h.b16 %v257
    %v510 = vunpack.c.l.b16 %v258
    %v511 = vunpack.c.h.b16 %v258
    %v512 = vunpack.c.l.b16 %v259
    %v513 = vunpack.c.h.b16 %v259
    %v514 = vunpack.c.l.b16 %v260
    %v515 = vunpack.c.h.b16 %v260
    %v516 = vunpack.c.l.b16 %v261
    %v517 = vunpack.c.h.b16 %v261
    %v518 = vunpack.c.l.b16 %v262
    %v519 = vunpack.c.h.b16 %v262
    %v520 = vunpack.c.l.b16 %v263
    %v521 = vunpack.c.h.b16 %v263
    %v522 = vunpack.c.l.b16 %v264
    %v523 = vunpack.c.h.b16 %v264
    %v524 = vunpack.c.l.b16 %v265
    %v525 = vunpack.c.h.b16 %v265
    %v526 = vunpack.c.l.b16 %v266
    %v527 = vunpack.c.h.b16 %v266
    %v528 = vunpack.c.l.b16 %v267
    %v529 = vunpack.c.h.b16 %v267
    %v530 = vunpack.c.l.b16 %v268
    %v531 = vunpack.c.h.b16 %v268
    %v532 = vunpack.c.l.b16 %v269
    %v533 = vunpack.c.h.b16 %v269
    %v534 = vunpack.c.l.b16 %v270
    %v535 = vunpack.c.h.b16 %v270
    %v536 = vunpack.c.l.b16 %v271
    %v537 = vunpack.c.h.b16 %v271
    %v538 = vunpack.c.l.b16 %v272
    %v539 = vunpack.c.h.b16 %v272
    %v540 = vunpack.c.l.b16 %v273
    %v541 = vunpack.c.h.b16 %v273
    %v542 = vunpack.c.l.b16 %v274
    %v543 = vunpack.c.h.b16 %v274
    %v544 = vunpack.c.l.b16 %v275
    %v545 = vunpack.c.h.b16 %v275
    %v546 = vunpack.c.l.b16 %v276
    %v547 = vunpack.c.h.b16 %v276
    %v548 = vunpack.c.l.b16 %v277
    %v549 = vunpack.c.h.b16 %v277
    %v550 = vunpack.c.l.b16 %v278
    %v551 = vunpack.c.h.b16 %v278
    %v552 = vunpack.c.l.b16 %v279
    %v553 = vunpack.c.h.b16 %v279
    %v554 = vunpack.c.l.b16 %v280
    %v555 = vunpack.c.h.b16 %v280
    %v556 = vunpack.c.l.b16 %v281
    %v557 = vunpack.c.h.b16 %v281
    %v558 = vunpack.c.l.b16 %v282
    %v559 = vunpack.c.h.b16 %v282
    %v560 = vunpack.c.l.b16 %v283
    %v561 = vunpack.c.h.b16 %v283
    %v562 = vunpack.c.l.b16 %v284
    %v563 = vunpack.c.h.b16 %v284
    %v564 = vunpack.c.l.b16 %v285
    %v565 = vunpack.c.h.b16 %v285
    %v566 = vunpack.c.l.b16 %v286
    %v567 = vunpack.c.h.b16 %v286
    %v568 = vunpack.c.l.b16 %v287
    %v569 = vunpack.c.h.b16 %v287
    %v570 = vunpack.c.l.b16 %v288
    %v571 = vunpack.c.h.b16 %v288
    %v572 = vunpack.c.l.b16 %v289
    %v573 = vunpack.c.h.b16 %v289
    %v574 = vunpack.c.l.b16 %v290
    %v575 = vunpack.c.h.b16 %v290
    %v576 = vunpack.c.l.b16 %v291
    %v577 = vunpack.c.h.b16 %v291
    %v578 = vunpack.c.l.b16 %v292
    %v579 = vunpack.c.h.b16 %v292
    %v580 = vunpack.c.l.b16 %v293
    %v581 = vunpack.c.h.b16 %v293
    %v582 = vunpack.c.l.b16 %v294
    %v583 = vunpack.c.h.b16 %v294
    %v584 = vunpack.c.l.b16 %v295
    %v585 = vunpack.c.h.b16 %v295
    %v586 = vunpack.c.l.b16 %v296
    %v587 = vunpack.c.h.b16 %v296
    %v588 = vunpack.c.l.b16 %v297
    %v589 = vunpack.c.h.b16 %v297
    %v590 = vunpack.c.l.b16 %v298
    %v591 = vunpack.c.h.b16 %v298
    %v592 = vunpack.c.l.b16 %v299
    %v593 = vunpack.c.h.b16 %v299
    %v594 = vpack.c.b16 %v400, %v398
    %v595 = vpack.c.b16 %v401, %v399
    %v596 = vpack.c.b16 %v404, %v402
    %v597 = vpack.c.b16 %v405, %v403
    %v598 = vpack.c.b16 %v408, %v406
    %v599 = vpack.c.b16 %v409, %v407
    %v600 = vpack.c.b16 %v412, %v410
    %v601 = vpack.c.b16 %v413, %v411
    %v602 = vpack.c.b16 %v416, %v414
    %v603 = vpack.c.b16 %v417, %v415
    %v604 = vpack.c.b16 %v420, %v418
    %v605 = vpack.c.b16 %v421, %v419
    %v606 = vpack.c.b16 %v424, %v422
    %v607 = vpack.c.b16 %v425, %v423
    %v608 = vpack.c.b16 %v428, %v426
    %v609 = vpack.c.b16 %v429, %v427
    %v610 = vpack.c.b16 %v432, %v430
    %v611 = vpack.c.b16 %v433, %v431
    %v612 = vpack.c.b16 %v436, %v434
    %v613 = vpack.c.b16 %v437, %v435
    %v614 = vpack.c.b16 %v440, %v438
    %v615 = vpack.c.b16 %v441, %v439
    %v616 = vpack.c.b16 %v444, %v442
    %v617 = vpack.c.b16 %v445, %v443
    %v618 = vpack.c.b16 %v448, %v446
    %v619 = vpack.c.b16 %v449, %v447
    %v620 = vpack.c.b16 %v452, %v450
    %v621 = vpack.c.b16 %v453, %v451
    %v622 = vpack.c.b16 %v456, %v454
    %v623 = vpack.c.b16 %v457, %v455
    %v624 = vpack.c.b16 %v460, %v458
    %v625 = vpack.c.b16 %v461, %v459
    %v626 = vpack.c.b16 %v464, %v462
    %v627 = vpack.c.b16 %v465, %v463
    %v628 = vpack.c.b16 %v468, %v466
    %v629 = vpack.c.b16 %v469, %v467
    %v630 = vpack.c.b16 %v472, %v470
    %v631 = vpack.c.b16 %v473, %v471
    %v632 = vpack.c.b16 %v476, %v474
    %v633 = vpack.c.b16 %v477, %v475
    %v634 = vpack.c.b16 %v480, %v478
    %v635 = vpack.c.b16 %v481, %v479
    %v636 = vpack.c.b16 %v484, %v482
    %v637 = vpack.c.b16 %v485, %v483
    %v638 = vpack.c.b16 %v488, %v486
    %v639 = vpack.c.b16 %v489, %v487
    %v640 = vpack.c.b16 %v492, %v490
    %v641 = vpack.c.b16 %v493, %v491
    %v642 = vpack.c.b16 %v496, %v494
    %v643 = vpack.c.b16 %v497, %v495
    %v644 = vpack.c.b16 %v500, %v498
    %v645 = vpack.c.b16 %v501, %v499
    %v646 = vpack.c.b16 %v504, %v502
    %v647 = vpack.c.b16 %v505, %v503
    %v648 = vpack.c.b16 %v508, %v506
    %v649 = vpack.c.b16 %v509, %v507
    %v650 = vpack.c.b16 %v512, %v510
    %v651 = vpack.c.b16 %v513, %v511
    %v652 = vpack.c.b16 %v516, %v514
    %v653 = vpack.c.b16 %v517, %v515
    %v654 = vpack.c.b16 %v520, %v518
    %v655 = vpack.c.b16 %v521, %v519
    %v656 = vpack.c.b16 %v524, %v522
    %v657 = vpack.c.b16 %v525, %v523
    %v658 = vpack.c.b16 %v528, %v526
    %v659 = vpack.c.b16 %v529, %v527
    %v660 = vpack.c.b16 %v532, %v530
    %v661 = vpack.c.b16 %v533, %v531
    %v662 = vpack.c.b16 %v536, %v534
    %v663 = vpack.c.b16 %v537, %v535
    %v664 = vpack.c.b16 %v540, %v538
    %v665 = vpack.c.b16 %v541, %v539
    %v666 = vpack.c.b16 %v544, %v542
    %v667 = vpack.c.b16 %v545, %v543
    %v668 = vpack.c.b16 %v548, %v546
    %v669 = vpack.c.b16 %v549, %v547
    %v670 = vpack.c.b16 %v552, %v550
    %v671 = vpack.c.b16 %v553, %v551
    %v672 = vpack.c.b16 %v556, %v554
    %v673 = vpack.c.b16 %v557, %v555
    %v674 = vpack.c.b16 %v560, %v558
    %v675 = vpack.c.b16 %v561, %v559
    %v676 = vpack.c.b16 %v564, %v562
    %v677 = vpack.c.b16 %v565, %v563
    %v678 = vpack.c.b16 %v568, %v566
    %v679 = vpack.c.b16 %v569, %v567
    %v680 = vpack.c.b16 %v572, %v570
    %v681 = vpack.c.b16 %v573, %v571
    %v682 = vpack.c.b16 %v576, %v574
    %v683 = vpack.c.b16 %v577, %v575
    %v684 = vpack.c.b16 %v580, %v578
    %v685 = vpack.c.b16 %v581, %v579
    %v686 = vpack.c.b16 %v584, %v582
    %v687 = vpack.c.b16 %v585, %v583
    %v688 = vpack.c.b16 %v588, %v586
    %v689 = vpack.c.b16 %v589, %v587
    %v690 = vpack.c.b16 %v592, %v590
    %v691 = vpack.c.b16 %v593, %v591
    %vm790 = vcmask 130048
    %v792 = vsel %vm790, %v152, 0
    %v795 = vsel %vm790, %v159, 0
    %v798 = vsel %vm790, %v166, 0
    %v801 = vsel %vm790, %v173, 0
    %v804 = vsel %vm790, %v180, 0
    %v807 = vsel %vm790, %v187, 0
    %v810 = vsel %vm790, %v194, 0
    %v813 = vsel %vm790, %v201, 0
    %815 = vmatpush.bf16.msra.mxu0 %v608
    %816 = vmatpush.bf16.msra.mxu0 %v606
    %817 = vmatpush.bf16.msra.mxu0 %v604
    %818 = vmatpush.bf16.msra.mxu0 %v602
    %819 = vmatpush.bf16.msra.mxu0 %v600
    %820 = vmatpush.bf16.msra.mxu0 %v598
    %821 = vmatpush.bf16.msra.mxu0 %v596
    %822 = vmatpush.bf16.msra.mxu0 %v594
    %823 = vmatmul.bf16.gmra.mxu0 %v146
    %v824 = vpop.f32.mrf.mxu0
    %v825 = vadd.f32 0.0, %v824
    %v826 = vpop.f32.mrf.mxu0
    %v827 = vadd.f32 0.0, %v826
    %828 = vmatmul.bf16.gmra.mxu0 %v153
    %v829 = vpop.f32.mrf.mxu0
    %v830 = vadd.f32 0.0, %v829
    %v831 = vpop.f32.mrf.mxu0
    %v832 = vadd.f32 0.0, %v831
    %833 = vmatmul.bf16.gmra.mxu0 %v160
    %v834 = vpop.f32.mrf.mxu0
    %v835 = vadd.f32 0.0, %v834
    %v836 = vpop.f32.mrf.mxu0
    %v837 = vadd.f32 0.0, %v836
    %838 = vmatmul.bf16.gmra.mxu0 %v167
    %v839 = vpop.f32.mrf.mxu0
    %v840 = vadd.f32 0.0, %v839
    %v841 = vpop.f32.mrf.mxu0
    %v842 = vadd.f32 0.0, %v841
    %843 = vmatmul.bf16.gmra.mxu0 %v174
    %v844 = vpop.f32.mrf.mxu0
    %v845 = vadd.f32 0.0, %v844
    %v846 = vpop.f32.mrf.mxu0
    %v847 = vadd.f32 0.0, %v846
    %848 = vmatmul.bf16.gmra.mxu0 %v181
    %v849 = vpop.f32.mrf.mxu0
    %v850 = vadd.f32 0.0, %v849
    %v851 = vpop.f32.mrf.mxu0
    %v852 = vadd.f32 0.0, %v851
    %853 = vmatmul.bf16.gmra.mxu0 %v188
    %v854 = vpop.f32.mrf.mxu0
    %v855 = vadd.f32 0.0, %v854
    %v856 = vpop.f32.mrf.mxu0
    %v857 = vadd.f32 0.0, %v856
    %858 = vmatmul.bf16.gmra.mxu0 %v195
    %v859 = vpop.f32.mrf.mxu0
    %v860 = vadd.f32 0.0, %v859
    %v861 = vpop.f32.mrf.mxu0
    %v862 = vadd.f32 0.0, %v861
    %863 = vdwg.mxu0
    %864 = vmatpush.bf16.msra.mxu0 %v624
    %865 = vmatpush.bf16.msra.mxu0 %v622
    %866 = vmatpush.bf16.msra.mxu0 %v620
    %867 = vmatpush.bf16.msra.mxu0 %v618
    %868 = vmatpush.bf16.msra.mxu0 %v616
    %869 = vmatpush.bf16.msra.mxu0 %v614
    %870 = vmatpush.bf16.msra.mxu0 %v612
    %871 = vmatpush.bf16.msra.mxu0 %v610
    %872 = vmatmul.bf16.gmra.mxu0 %v147
    %v873 = vpop.f32.mrf.mxu0
    %v874 = vadd.f32 %v825, %v873
    %v875 = vpop.f32.mrf.mxu0
    %v876 = vadd.f32 %v827, %v875
    %877 = vmatmul.bf16.gmra.mxu0 %v154
    %v878 = vpop.f32.mrf.mxu0
    %v879 = vadd.f32 %v830, %v878
    %v880 = vpop.f32.mrf.mxu0
    %v881 = vadd.f32 %v832, %v880
    %882 = vmatmul.bf16.gmra.mxu0 %v161
    %v883 = vpop.f32.mrf.mxu0
    %v884 = vadd.f32 %v835, %v883
    %v885 = vpop.f32.mrf.mxu0
    %v886 = vadd.f32 %v837, %v885
    %887 = vmatmul.bf16.gmra.mxu0 %v168
    %v888 = vpop.f32.mrf.mxu0
    %v889 = vadd.f32 %v840, %v888
    %v890 = vpop.f32.mrf.mxu0
    %v891 = vadd.f32 %v842, %v890
    %892 = vmatmul.bf16.gmra.mxu0 %v175
    %v893 = vpop.f32.mrf.mxu0
    %v894 = vadd.f32 %v845, %v893
    %v895 = vpop.f32.mrf.mxu0
    %v896 = vadd.f32 %v847, %v895
    %897 = vmatmul.bf16.gmra.mxu0 %v182
    %v898 = vpop.f32.mrf.mxu0
    %v899 = vadd.f32 %v850, %v898
    %v900 = vpop.f32.mrf.mxu0
    %v901 = vadd.f32 %v852, %v900
    %902 = vmatmul.bf16.gmra.mxu0 %v189
    %v903 = vpop.f32.mrf.mxu0
    %v904 = vadd.f32 %v855, %v903
    %v905 = vpop.f32.mrf.mxu0
    %v906 = vadd.f32 %v857, %v905
    %907 = vmatmul.bf16.gmra.mxu0 %v196
    %v908 = vpop.f32.mrf.mxu0
    %v909 = vadd.f32 %v860, %v908
    %v910 = vpop.f32.mrf.mxu0
    %v911 = vadd.f32 %v862, %v910
    %912 = vdwg.mxu0
    %913 = vmatpush.bf16.msra.mxu0 %v640
    %914 = vmatpush.bf16.msra.mxu0 %v638
    %915 = vmatpush.bf16.msra.mxu0 %v636
    %916 = vmatpush.bf16.msra.mxu0 %v634
    %917 = vmatpush.bf16.msra.mxu0 %v632
    %918 = vmatpush.bf16.msra.mxu0 %v630
    %919 = vmatpush.bf16.msra.mxu0 %v628
    %920 = vmatpush.bf16.msra.mxu0 %v626
    %921 = vmatmul.bf16.gmra.mxu0 %v148
    %v922 = vpop.f32.mrf.mxu0
    %v923 = vadd.f32 %v874, %v922
    %v924 = vpop.f32.mrf.mxu0
    %v925 = vadd.f32 %v876, %v924
    %926 = vmatmul.bf16.gmra.mxu0 %v155
    %v927 = vpop.f32.mrf.mxu0
    %v928 = vadd.f32 %v879, %v927
    %v929 = vpop.f32.mrf.mxu0
    %v930 = vadd.f32 %v881, %v929
    %931 = vmatmul.bf16.gmra.mxu0 %v162
    %v932 = vpop.f32.mrf.mxu0
    %v933 = vadd.f32 %v884, %v932
    %v934 = vpop.f32.mrf.mxu0
    %v935 = vadd.f32 %v886, %v934
    %936 = vmatmul.bf16.gmra.mxu0 %v169
    %v937 = vpop.f32.mrf.mxu0
    %v938 = vadd.f32 %v889, %v937
    %v939 = vpop.f32.mrf.mxu0
    %v940 = vadd.f32 %v891, %v939
    %941 = vmatmul.bf16.gmra.mxu0 %v176
    %v942 = vpop.f32.mrf.mxu0
    %v943 = vadd.f32 %v894, %v942
    %v944 = vpop.f32.mrf.mxu0
    %v945 = vadd.f32 %v896, %v944
    %946 = vmatmul.bf16.gmra.mxu0 %v183
    %v947 = vpop.f32.mrf.mxu0
    %v948 = vadd.f32 %v899, %v947
    %v949 = vpop.f32.mrf.mxu0
    %v950 = vadd.f32 %v901, %v949
    %951 = vmatmul.bf16.gmra.mxu0 %v190
    %v952 = vpop.f32.mrf.mxu0
    %v953 = vadd.f32 %v904, %v952
    %v954 = vpop.f32.mrf.mxu0
    %v955 = vadd.f32 %v906, %v954
    %956 = vmatmul.bf16.gmra.mxu0 %v197
    %v957 = vpop.f32.mrf.mxu0
    %v958 = vadd.f32 %v909, %v957
    %v959 = vpop.f32.mrf.mxu0
    %v960 = vadd.f32 %v911, %v959
    %961 = vdwg.mxu0
    %962 = vmatpush.bf16.msra.mxu0 %v656
    %963 = vmatpush.bf16.msra.mxu0 %v654
    %964 = vmatpush.bf16.msra.mxu0 %v652
    %965 = vmatpush.bf16.msra.mxu0 %v650
    %966 = vmatpush.bf16.msra.mxu0 %v648
    %967 = vmatpush.bf16.msra.mxu0 %v646
    %968 = vmatpush.bf16.msra.mxu0 %v644
    %969 = vmatpush.bf16.msra.mxu0 %v642
    %970 = vmatmul.bf16.gmra.mxu0 %v149
    %v971 = vpop.f32.mrf.mxu0
    %v972 = vadd.f32 %v923, %v971
    %v973 = vpop.f32.mrf.mxu0
    %v974 = vadd.f32 %v925, %v973
    %975 = vmatmul.bf16.gmra.mxu0 %v156
    %v976 = vpop.f32.mrf.mxu0
    %v977 = vadd.f32 %v928, %v976
    %v978 = vpop.f32.mrf.mxu0
    %v979 = vadd.f32 %v930, %v978
    %980 = vmatmul.bf16.gmra.mxu0 %v163
    %v981 = vpop.f32.mrf.mxu0
    %v982 = vadd.f32 %v933, %v981
    %v983 = vpop.f32.mrf.mxu0
    %v984 = vadd.f32 %v935, %v983
    %985 = vmatmul.bf16.gmra.mxu0 %v170
    %v986 = vpop.f32.mrf.mxu0
    %v987 = vadd.f32 %v938, %v986
    %v988 = vpop.f32.mrf.mxu0
    %v989 = vadd.f32 %v940, %v988
    %990 = vmatmul.bf16.gmra.mxu0 %v177
    %v991 = vpop.f32.mrf.mxu0
    %v992 = vadd.f32 %v943, %v991
    %v993 = vpop.f32.mrf.mxu0
    %v994 = vadd.f32 %v945, %v993
    %995 = vmatmul.bf16.gmra.mxu0 %v184
    %v996 = vpop.f32.mrf.mxu0
    %v997 = vadd.f32 %v948, %v996
    %v998 = vpop.f32.mrf.mxu0
    %v999 = vadd.f32 %v950, %v998
    %1000 = vmatmul.bf16.gmra.mxu0 %v191
    %v1001 = vpop.f32.mrf.mxu0
    %v1002 = vadd.f32 %v953, %v1001
    %v1003 = vpop.f32.mrf.mxu0
    %v1004 = vadd.f32 %v955, %v1003
    %1005 = vmatmul.bf16.gmra.mxu0 %v198
    %v1006 = vpop.f32.mrf.mxu0
    %v1007 = vadd.f32 %v958, %v1006
    %v1008 = vpop.f32.mrf.mxu0
    %v1009 = vadd.f32 %v960, %v1008
    %1010 = vdwg.mxu0
    %1011 = vmatpush.bf16.msra.mxu0 %v672
    %1012 = vmatpush.bf16.msra.mxu0 %v670
    %1013 = vmatpush.bf16.msra.mxu0 %v668
    %1014 = vmatpush.bf16.msra.mxu0 %v666
    %1015 = vmatpush.bf16.msra.mxu0 %v664
    %1016 = vmatpush.bf16.msra.mxu0 %v662
    %1017 = vmatpush.bf16.msra.mxu0 %v660
    %1018 = vmatpush.bf16.msra.mxu0 %v658
    %1019 = vmatmul.bf16.gmra.mxu0 %v150
    %v1020 = vpop.f32.mrf.mxu0
    %v1021 = vadd.f32 %v972, %v1020
    %v1022 = vpop.f32.mrf.mxu0
    %v1023 = vadd.f32 %v974, %v1022
    %1024 = vmatmul.bf16.gmra.mxu0 %v157
    %v1025 = vpop.f32.mrf.mxu0
    %v1026 = vadd.f32 %v977, %v1025
    %v1027 = vpop.f32.mrf.mxu0
    %v1028 = vadd.f32 %v979, %v1027
    %1029 = vmatmul.bf16.gmra.mxu0 %v164
    %v1030 = vpop.f32.mrf.mxu0
    %v1031 = vadd.f32 %v982, %v1030
    %v1032 = vpop.f32.mrf.mxu0
    %v1033 = vadd.f32 %v984, %v1032
    %1034 = vmatmul.bf16.gmra.mxu0 %v171
    %v1035 = vpop.f32.mrf.mxu0
    %v1036 = vadd.f32 %v987, %v1035
    %v1037 = vpop.f32.mrf.mxu0
    %v1038 = vadd.f32 %v989, %v1037
    %1039 = vmatmul.bf16.gmra.mxu0 %v178
    %v1040 = vpop.f32.mrf.mxu0
    %v1041 = vadd.f32 %v992, %v1040
    %v1042 = vpop.f32.mrf.mxu0
    %v1043 = vadd.f32 %v994, %v1042
    %1044 = vmatmul.bf16.gmra.mxu0 %v185
    %v1045 = vpop.f32.mrf.mxu0
    %v1046 = vadd.f32 %v997, %v1045
    %v1047 = vpop.f32.mrf.mxu0
    %v1048 = vadd.f32 %v999, %v1047
    %1049 = vmatmul.bf16.gmra.mxu0 %v192
    %v1050 = vpop.f32.mrf.mxu0
    %v1051 = vadd.f32 %v1002, %v1050
    %v1052 = vpop.f32.mrf.mxu0
    %v1053 = vadd.f32 %v1004, %v1052
    %1054 = vmatmul.bf16.gmra.mxu0 %v199
    %v1055 = vpop.f32.mrf.mxu0
    %v1056 = vadd.f32 %v1007, %v1055
    %v1057 = vpop.f32.mrf.mxu0
    %v1058 = vadd.f32 %v1009, %v1057
    %1059 = vdwg.mxu0
    %1060 = vmatpush.bf16.msra.mxu0 %v688
    %1061 = vmatpush.bf16.msra.mxu0 %v686
    %1062 = vmatpush.bf16.msra.mxu0 %v684
    %1063 = vmatpush.bf16.msra.mxu0 %v682
    %1064 = vmatpush.bf16.msra.mxu0 %v680
    %1065 = vmatpush.bf16.msra.mxu0 %v678
    %1066 = vmatpush.bf16.msra.mxu0 %v676
    %1067 = vmatpush.bf16.msra.mxu0 %v674
    %1068 = vmatmul.bf16.gmra.mxu0 %v151
    %v1069 = vpop.f32.mrf.mxu0
    %v1070 = vadd.f32 %v1021, %v1069
    %v1071 = vpop.f32.mrf.mxu0
    %v1072 = vadd.f32 %v1023, %v1071
    %1073 = vmatmul.bf16.gmra.mxu0 %v158
    %v1074 = vpop.f32.mrf.mxu0
    %v1075 = vadd.f32 %v1026, %v1074
    %v1076 = vpop.f32.mrf.mxu0
    %v1077 = vadd.f32 %v1028, %v1076
    %1078 = vmatmul.bf16.gmra.mxu0 %v165
    %v1079 = vpop.f32.mrf.mxu0
    %v1080 = vadd.f32 %v1031, %v1079
    %v1081 = vpop.f32.mrf.mxu0
    %v1082 = vadd.f32 %v1033, %v1081
    %1083 = vmatmul.bf16.gmra.mxu0 %v172
    %v1084 = vpop.f32.mrf.mxu0
    %v1085 = vadd.f32 %v1036, %v1084
    %v1086 = vpop.f32.mrf.mxu0
    %v1087 = vadd.f32 %v1038, %v1086
    %1088 = vmatmul.bf16.gmra.mxu0 %v179
    %v1089 = vpop.f32.mrf.mxu0
    %v1090 = vadd.f32 %v1041, %v1089
    %v1091 = vpop.f32.mrf.mxu0
    %v1092 = vadd.f32 %v1043, %v1091
    %1093 = vmatmul.bf16.gmra.mxu0 %v186
    %v1094 = vpop.f32.mrf.mxu0
    %v1095 = vadd.f32 %v1046, %v1094
    %v1096 = vpop.f32.mrf.mxu0
    %v1097 = vadd.f32 %v1048, %v1096
    %1098 = vmatmul.bf16.gmra.mxu0 %v193
    %v1099 = vpop.f32.mrf.mxu0
    %v1100 = vadd.f32 %v1051, %v1099
    %v1101 = vpop.f32.mrf.mxu0
    %v1102 = vadd.f32 %v1053, %v1101
    %1103 = vmatmul.bf16.gmra.mxu0 %v200
    %v1104 = vpop.f32.mrf.mxu0
    %v1105 = vadd.f32 %v1056, %v1104
    %v1106 = vpop.f32.mrf.mxu0
    %v1107 = vadd.f32 %v1058, %v1106
    %1108 = vdwg.mxu0
    %1109 = vmatpush.bf16.msra.mxu0 0
    %1110 = vmatpush.bf16.msra.mxu0 0
    %1111 = vmatpush.bf16.msra.mxu0 0
    %1112 = vmatpush.bf16.msra.mxu0 0
    %1113 = vmatpush.bf16.msra.mxu0 0
    %1114 = vmatpush.bf16.msra.mxu0 0
    %1115 = vmatpush.bf16.msra.mxu0 0
    %1116 = vmatpush.bf16.msra.mxu0 %v690
    %1117 = vmatmul.bf16.gmra.mxu0 %v792
    %v1118 = vpop.f32.mrf.mxu0
    %v1119 = vadd.f32 %v1070, %v1118
    %v1120 = vpop.f32.mrf.mxu0
    %v1121 = vadd.f32 %v1072, %v1120
    %1122 = vmatmul.bf16.gmra.mxu0 %v795
    %v1123 = vpop.f32.mrf.mxu0
    %v1124 = vadd.f32 %v1075, %v1123
    %v1125 = vpop.f32.mrf.mxu0
    %v1126 = vadd.f32 %v1077, %v1125
    %1127 = vmatmul.bf16.gmra.mxu0 %v798
    %v1128 = vpop.f32.mrf.mxu0
    %v1129 = vadd.f32 %v1080, %v1128
    %v1130 = vpop.f32.mrf.mxu0
    %v1131 = vadd.f32 %v1082, %v1130
    %1132 = vmatmul.bf16.gmra.mxu0 %v801
    %v1133 = vpop.f32.mrf.mxu0
    %v1134 = vadd.f32 %v1085, %v1133
    %v1135 = vpop.f32.mrf.mxu0
    %v1136 = vadd.f32 %v1087, %v1135
    %1137 = vmatmul.bf16.gmra.mxu0 %v804
    %v1138 = vpop.f32.mrf.mxu0
    %v1139 = vadd.f32 %v1090, %v1138
    %v1140 = vpop.f32.mrf.mxu0
    %v1141 = vadd.f32 %v1092, %v1140
    %1142 = vmatmul.bf16.gmra.mxu0 %v807
    %v1143 = vpop.f32.mrf.mxu0
    %v1144 = vadd.f32 %v1095, %v1143
    %v1145 = vpop.f32.mrf.mxu0
    %v1146 = vadd.f32 %v1097, %v1145
    %1147 = vmatmul.bf16.gmra.mxu0 %v810
    %v1148 = vpop.f32.mrf.mxu0
    %v1149 = vadd.f32 %v1100, %v1148
    %v1150 = vpop.f32.mrf.mxu0
    %v1151 = vadd.f32 %v1102, %v1150
    %1152 = vmatmul.bf16.gmra.mxu0 %v813
    %v1153 = vpop.f32.mrf.mxu0
    %v1154 = vadd.f32 %v1105, %v1153
    %v1155 = vpop.f32.mrf.mxu0
    %v1156 = vadd.f32 %v1107, %v1155
    %1157 = vdwg.mxu0
    %1158 = vmatpush.bf16.msra.mxu0 %v609
    %1159 = vmatpush.bf16.msra.mxu0 %v607
    %1160 = vmatpush.bf16.msra.mxu0 %v605
    %1161 = vmatpush.bf16.msra.mxu0 %v603
    %1162 = vmatpush.bf16.msra.mxu0 %v601
    %1163 = vmatpush.bf16.msra.mxu0 %v599
    %1164 = vmatpush.bf16.msra.mxu0 %v597
    %1165 = vmatpush.bf16.msra.mxu0 %v595
    %1166 = vmatmul.bf16.gmra.mxu0 %v146
    %v1167 = vpop.f32.mrf.mxu0
    %v1168 = vadd.f32 0.0, %v1167
    %v1169 = vpop.f32.mrf.mxu0
    %v1170 = vadd.f32 0.0, %v1169
    %1171 = vmatmul.bf16.gmra.mxu0 %v153
    %v1172 = vpop.f32.mrf.mxu0
    %v1173 = vadd.f32 0.0, %v1172
    %v1174 = vpop.f32.mrf.mxu0
    %v1175 = vadd.f32 0.0, %v1174
    %1176 = vmatmul.bf16.gmra.mxu0 %v160
    %v1177 = vpop.f32.mrf.mxu0
    %v1178 = vadd.f32 0.0, %v1177
    %v1179 = vpop.f32.mrf.mxu0
    %v1180 = vadd.f32 0.0, %v1179
    %1181 = vmatmul.bf16.gmra.mxu0 %v167
    %v1182 = vpop.f32.mrf.mxu0
    %v1183 = vadd.f32 0.0, %v1182
    %v1184 = vpop.f32.mrf.mxu0
    %v1185 = vadd.f32 0.0, %v1184
    %1186 = vmatmul.bf16.gmra.mxu0 %v174
    %v1187 = vpop.f32.mrf.mxu0
    %v1188 = vadd.f32 0.0, %v1187
    %v1189 = vpop.f32.mrf.mxu0
    %v1190 = vadd.f32 0.0, %v1189
    %1191 = vmatmul.bf16.gmra.mxu0 %v181
    %v1192 = vpop.f32.mrf.mxu0
    %v1193 = vadd.f32 0.0, %v1192
    %v1194 = vpop.f32.mrf.mxu0
    %v1195 = vadd.f32 0.0, %v1194
    %1196 = vmatmul.bf16.gmra.mxu0 %v188
    %v1197 = vpop.f32.mrf.mxu0
    %v1198 = vadd.f32 0.0, %v1197
    %v1199 = vpop.f32.mrf.mxu0
    %v1200 = vadd.f32 0.0, %v1199
    %1201 = vmatmul.bf16.gmra.mxu0 %v195
    %v1202 = vpop.f32.mrf.mxu0
    %v1203 = vadd.f32 0.0, %v1202
    %v1204 = vpop.f32.mrf.mxu0
    %v1205 = vadd.f32 0.0, %v1204
    %1206 = vdwg.mxu0
    %1207 = vmatpush.bf16.msra.mxu0 %v625
    %1208 = vmatpush.bf16.msra.mxu0 %v623
    %1209 = vmatpush.bf16.msra.mxu0 %v621
    %1210 = vmatpush.bf16.msra.mxu0 %v619
    %1211 = vmatpush.bf16.msra.mxu0 %v617
    %1212 = vmatpush.bf16.msra.mxu0 %v615
    %1213 = vmatpush.bf16.msra.mxu0 %v613
    %1214 = vmatpush.bf16.msra.mxu0 %v611
    %1215 = vmatmul.bf16.gmra.mxu0 %v147
    %v1216 = vpop.f32.mrf.mxu0
    %v1217 = vadd.f32 %v1168, %v1216
    %v1218 = vpop.f32.mrf.mxu0
    %v1219 = vadd.f32 %v1170, %v1218
    %1220 = vmatmul.bf16.gmra.mxu0 %v154
    %v1221 = vpop.f32.mrf.mxu0
    %v1222 = vadd.f32 %v1173, %v1221
    %v1223 = vpop.f32.mrf.mxu0
    %v1224 = vadd.f32 %v1175, %v1223
    %1225 = vmatmul.bf16.gmra.mxu0 %v161
    %v1226 = vpop.f32.mrf.mxu0
    %v1227 = vadd.f32 %v1178, %v1226
    %v1228 = vpop.f32.mrf.mxu0
    %v1229 = vadd.f32 %v1180, %v1228
    %1230 = vmatmul.bf16.gmra.mxu0 %v168
    %v1231 = vpop.f32.mrf.mxu0
    %v1232 = vadd.f32 %v1183, %v1231
    %v1233 = vpop.f32.mrf.mxu0
    %v1234 = vadd.f32 %v1185, %v1233
    %1235 = vmatmul.bf16.gmra.mxu0 %v175
    %v1236 = vpop.f32.mrf.mxu0
    %v1237 = vadd.f32 %v1188, %v1236
    %v1238 = vpop.f32.mrf.mxu0
    %v1239 = vadd.f32 %v1190, %v1238
    %1240 = vmatmul.bf16.gmra.mxu0 %v182
    %v1241 = vpop.f32.mrf.mxu0
    %v1242 = vadd.f32 %v1193, %v1241
    %v1243 = vpop.f32.mrf.mxu0
    %v1244 = vadd.f32 %v1195, %v1243
    %1245 = vmatmul.bf16.gmra.mxu0 %v189
    %v1246 = vpop.f32.mrf.mxu0
    %v1247 = vadd.f32 %v1198, %v1246
    %v1248 = vpop.f32.mrf.mxu0
    %v1249 = vadd.f32 %v1200, %v1248
    %1250 = vmatmul.bf16.gmra.mxu0 %v196
    %v1251 = vpop.f32.mrf.mxu0
    %v1252 = vadd.f32 %v1203, %v1251
    %v1253 = vpop.f32.mrf.mxu0
    %v1254 = vadd.f32 %v1205, %v1253
    %1255 = vdwg.mxu0
    %1256 = vmatpush.bf16.msra.mxu0 %v641
    %1257 = vmatpush.bf16.msra.mxu0 %v639
    %1258 = vmatpush.bf16.msra.mxu0 %v637
    %1259 = vmatpush.bf16.msra.mxu0 %v635
    %1260 = vmatpush.bf16.msra.mxu0 %v633
    %1261 = vmatpush.bf16.msra.mxu0 %v631
    %1262 = vmatpush.bf16.msra.mxu0 %v629
    %1263 = vmatpush.bf16.msra.mxu0 %v627
    %1264 = vmatmul.bf16.gmra.mxu0 %v148
    %v1265 = vpop.f32.mrf.mxu0
    %v1266 = vadd.f32 %v1217, %v1265
    %v1267 = vpop.f32.mrf.mxu0
    %v1268 = vadd.f32 %v1219, %v1267
    %1269 = vmatmul.bf16.gmra.mxu0 %v155
    %v1270 = vpop.f32.mrf.mxu0
    %v1271 = vadd.f32 %v1222, %v1270
    %v1272 = vpop.f32.mrf.mxu0
    %v1273 = vadd.f32 %v1224, %v1272
    %1274 = vmatmul.bf16.gmra.mxu0 %v162
    %v1275 = vpop.f32.mrf.mxu0
    %v1276 = vadd.f32 %v1227, %v1275
    %v1277 = vpop.f32.mrf.mxu0
    %v1278 = vadd.f32 %v1229, %v1277
    %1279 = vmatmul.bf16.gmra.mxu0 %v169
    %v1280 = vpop.f32.mrf.mxu0
    %v1281 = vadd.f32 %v1232, %v1280
    %v1282 = vpop.f32.mrf.mxu0
    %v1283 = vadd.f32 %v1234, %v1282
    %1284 = vmatmul.bf16.gmra.mxu0 %v176
    %v1285 = vpop.f32.mrf.mxu0
    %v1286 = vadd.f32 %v1237, %v1285
    %v1287 = vpop.f32.mrf.mxu0
    %v1288 = vadd.f32 %v1239, %v1287
    %1289 = vmatmul.bf16.gmra.mxu0 %v183
    %v1290 = vpop.f32.mrf.mxu0
    %v1291 = vadd.f32 %v1242, %v1290
    %v1292 = vpop.f32.mrf.mxu0
    %v1293 = vadd.f32 %v1244, %v1292
    %1294 = vmatmul.bf16.gmra.mxu0 %v190
    %v1295 = vpop.f32.mrf.mxu0
    %v1296 = vadd.f32 %v1247, %v1295
    %v1297 = vpop.f32.mrf.mxu0
    %v1298 = vadd.f32 %v1249, %v1297
    %1299 = vmatmul.bf16.gmra.mxu0 %v197
    %v1300 = vpop.f32.mrf.mxu0
    %v1301 = vadd.f32 %v1252, %v1300
    %v1302 = vpop.f32.mrf.mxu0
    %v1303 = vadd.f32 %v1254, %v1302
    %1304 = vdwg.mxu0
    %1305 = vmatpush.bf16.msra.mxu0 %v657
    %1306 = vmatpush.bf16.msra.mxu0 %v655
    %1307 = vmatpush.bf16.msra.mxu0 %v653
    %1308 = vmatpush.bf16.msra.mxu0 %v651
    %1309 = vmatpush.bf16.msra.mxu0 %v649
    %1310 = vmatpush.bf16.msra.mxu0 %v647
    %1311 = vmatpush.bf16.msra.mxu0 %v645
    %1312 = vmatpush.bf16.msra.mxu0 %v643
    %1313 = vmatmul.bf16.gmra.mxu0 %v149
    %v1314 = vpop.f32.mrf.mxu0
    %v1315 = vadd.f32 %v1266, %v1314
    %v1316 = vpop.f32.mrf.mxu0
    %v1317 = vadd.f32 %v1268, %v1316
    %1318 = vmatmul.bf16.gmra.mxu0 %v156
    %v1319 = vpop.f32.mrf.mxu0
    %v1320 = vadd.f32 %v1271, %v1319
    %v1321 = vpop.f32.mrf.mxu0
    %v1322 = vadd.f32 %v1273, %v1321
    %1323 = vmatmul.bf16.gmra.mxu0 %v163
    %v1324 = vpop.f32.mrf.mxu0
    %v1325 = vadd.f32 %v1276, %v1324
    %v1326 = vpop.f32.mrf.mxu0
    %v1327 = vadd.f32 %v1278, %v1326
    %1328 = vmatmul.bf16.gmra.mxu0 %v170
    %v1329 = vpop.f32.mrf.mxu0
    %v1330 = vadd.f32 %v1281, %v1329
    %v1331 = vpop.f32.mrf.mxu0
    %v1332 = vadd.f32 %v1283, %v1331
    %1333 = vmatmul.bf16.gmra.mxu0 %v177
    %v1334 = vpop.f32.mrf.mxu0
    %v1335 = vadd.f32 %v1286, %v1334
    %v1336 = vpop.f32.mrf.mxu0
    %v1337 = vadd.f32 %v1288, %v1336
    %1338 = vmatmul.bf16.gmra.mxu0 %v184
    %v1339 = vpop.f32.mrf.mxu0
    %v1340 = vadd.f32 %v1291, %v1339
    %v1341 = vpop.f32.mrf.mxu0
    %v1342 = vadd.f32 %v1293, %v1341
    %1343 = vmatmul.bf16.gmra.mxu0 %v191
    %v1344 = vpop.f32.mrf.mxu0
    %v1345 = vadd.f32 %v1296, %v1344
    %v1346 = vpop.f32.mrf.mxu0
    %v1347 = vadd.f32 %v1298, %v1346
    %1348 = vmatmul.bf16.gmra.mxu0 %v198
    %v1349 = vpop.f32.mrf.mxu0
    %v1350 = vadd.f32 %v1301, %v1349
    %v1351 = vpop.f32.mrf.mxu0
    %v1352 = vadd.f32 %v1303, %v1351
    %1353 = vdwg.mxu0
    %1354 = vmatpush.bf16.msra.mxu0 %v673
    %1355 = vmatpush.bf16.msra.mxu0 %v671
    %1356 = vmatpush.bf16.msra.mxu0 %v669
    %1357 = vmatpush.bf16.msra.mxu0 %v667
    %1358 = vmatpush.bf16.msra.mxu0 %v665
    %1359 = vmatpush.bf16.msra.mxu0 %v663
    %1360 = vmatpush.bf16.msra.mxu0 %v661
    %1361 = vmatpush.bf16.msra.mxu0 %v659
    %1362 = vmatmul.bf16.gmra.mxu0 %v150
    %v1363 = vpop.f32.mrf.mxu0
    %v1364 = vadd.f32 %v1315, %v1363
    %v1365 = vpop.f32.mrf.mxu0
    %v1366 = vadd.f32 %v1317, %v1365
    %1367 = vmatmul.bf16.gmra.mxu0 %v157
    %v1368 = vpop.f32.mrf.mxu0
    %v1369 = vadd.f32 %v1320, %v1368
    %v1370 = vpop.f32.mrf.mxu0
    %v1371 = vadd.f32 %v1322, %v1370
    %1372 = vmatmul.bf16.gmra.mxu0 %v164
    %v1373 = vpop.f32.mrf.mxu0
    %v1374 = vadd.f32 %v1325, %v1373
    %v1375 = vpop.f32.mrf.mxu0
    %v1376 = vadd.f32 %v1327, %v1375
    %1377 = vmatmul.bf16.gmra.mxu0 %v171
    %v1378 = vpop.f32.mrf.mxu0
    %v1379 = vadd.f32 %v1330, %v1378
    %v1380 = vpop.f32.mrf.mxu0
    %v1381 = vadd.f32 %v1332, %v1380
    %1382 = vmatmul.bf16.gmra.mxu0 %v178
    %v1383 = vpop.f32.mrf.mxu0
    %v1384 = vadd.f32 %v1335, %v1383
    %v1385 = vpop.f32.mrf.mxu0
    %v1386 = vadd.f32 %v1337, %v1385
    %1387 = vmatmul.bf16.gmra.mxu0 %v185
    %v1388 = vpop.f32.mrf.mxu0
    %v1389 = vadd.f32 %v1340, %v1388
    %v1390 = vpop.f32.mrf.mxu0
    %v1391 = vadd.f32 %v1342, %v1390
    %1392 = vmatmul.bf16.gmra.mxu0 %v192
    %v1393 = vpop.f32.mrf.mxu0
    %v1394 = vadd.f32 %v1345, %v1393
    %v1395 = vpop.f32.mrf.mxu0
    %v1396 = vadd.f32 %v1347, %v1395
    %1397 = vmatmul.bf16.gmra.mxu0 %v199
    %v1398 = vpop.f32.mrf.mxu0
    %v1399 = vadd.f32 %v1350, %v1398
    %v1400 = vpop.f32.mrf.mxu0
    %v1401 = vadd.f32 %v1352, %v1400
    %1402 = vdwg.mxu0
    %1403 = vmatpush.bf16.msra.mxu0 %v689
    %1404 = vmatpush.bf16.msra.mxu0 %v687
    %1405 = vmatpush.bf16.msra.mxu0 %v685
    %1406 = vmatpush.bf16.msra.mxu0 %v683
    %1407 = vmatpush.bf16.msra.mxu0 %v681
    %1408 = vmatpush.bf16.msra.mxu0 %v679
    %1409 = vmatpush.bf16.msra.mxu0 %v677
    %1410 = vmatpush.bf16.msra.mxu0 %v675
    %1411 = vmatmul.bf16.gmra.mxu0 %v151
    %v1412 = vpop.f32.mrf.mxu0
    %v1413 = vadd.f32 %v1364, %v1412
    %v1414 = vpop.f32.mrf.mxu0
    %v1415 = vadd.f32 %v1366, %v1414
    %1416 = vmatmul.bf16.gmra.mxu0 %v158
    %v1417 = vpop.f32.mrf.mxu0
    %v1418 = vadd.f32 %v1369, %v1417
    %v1419 = vpop.f32.mrf.mxu0
    %v1420 = vadd.f32 %v1371, %v1419
    %1421 = vmatmul.bf16.gmra.mxu0 %v165
    %v1422 = vpop.f32.mrf.mxu0
    %v1423 = vadd.f32 %v1374, %v1422
    %v1424 = vpop.f32.mrf.mxu0
    %v1425 = vadd.f32 %v1376, %v1424
    %1426 = vmatmul.bf16.gmra.mxu0 %v172
    %v1427 = vpop.f32.mrf.mxu0
    %v1428 = vadd.f32 %v1379, %v1427
    %v1429 = vpop.f32.mrf.mxu0
    %v1430 = vadd.f32 %v1381, %v1429
    %1431 = vmatmul.bf16.gmra.mxu0 %v179
    %v1432 = vpop.f32.mrf.mxu0
    %v1433 = vadd.f32 %v1384, %v1432
    %v1434 = vpop.f32.mrf.mxu0
    %v1435 = vadd.f32 %v1386, %v1434
    %1436 = vmatmul.bf16.gmra.mxu0 %v186
    %v1437 = vpop.f32.mrf.mxu0
    %v1438 = vadd.f32 %v1389, %v1437
    %v1439 = vpop.f32.mrf.mxu0
    %v1440 = vadd.f32 %v1391, %v1439
    %1441 = vmatmul.bf16.gmra.mxu0 %v193
    %v1442 = vpop.f32.mrf.mxu0
    %v1443 = vadd.f32 %v1394, %v1442
    %v1444 = vpop.f32.mrf.mxu0
    %v1445 = vadd.f32 %v1396, %v1444
    %1446 = vmatmul.bf16.gmra.mxu0 %v200
    %v1447 = vpop.f32.mrf.mxu0
    %v1448 = vadd.f32 %v1399, %v1447
    %v1449 = vpop.f32.mrf.mxu0
    %v1450 = vadd.f32 %v1401, %v1449
    %1451 = vdwg.mxu0
    %1452 = vmatpush.bf16.msra.mxu0 0
    %1453 = vmatpush.bf16.msra.mxu0 0
    %1454 = vmatpush.bf16.msra.mxu0 0
    %1455 = vmatpush.bf16.msra.mxu0 0
    %1456 = vmatpush.bf16.msra.mxu0 0
    %1457 = vmatpush.bf16.msra.mxu0 0
    %1458 = vmatpush.bf16.msra.mxu0 0
    %1459 = vmatpush.bf16.msra.mxu0 %v691
    %1460 = vmatmul.bf16.gmra.mxu0 %v792
    %v1461 = vpop.f32.mrf.mxu0
    %v1462 = vadd.f32 %v1413, %v1461
    %v1463 = vpop.f32.mrf.mxu0
    %v1464 = vadd.f32 %v1415, %v1463
    %1465 = vmatmul.bf16.gmra.mxu0 %v795
    %v1466 = vpop.f32.mrf.mxu0
    %v1467 = vadd.f32 %v1418, %v1466
    %v1468 = vpop.f32.mrf.mxu0
    %v1469 = vadd.f32 %v1420, %v1468
    %1470 = vmatmul.bf16.gmra.mxu0 %v798
    %v1471 = vpop.f32.mrf.mxu0
    %v1472 = vadd.f32 %v1423, %v1471
    %v1473 = vpop.f32.mrf.mxu0
    %v1474 = vadd.f32 %v1425, %v1473
    %1475 = vmatmul.bf16.gmra.mxu0 %v801
    %v1476 = vpop.f32.mrf.mxu0
    %v1477 = vadd.f32 %v1428, %v1476
    %v1478 = vpop.f32.mrf.mxu0
    %v1479 = vadd.f32 %v1430, %v1478
    %1480 = vmatmul.bf16.gmra.mxu0 %v804
    %v1481 = vpop.f32.mrf.mxu0
    %v1482 = vadd.f32 %v1433, %v1481
    %v1483 = vpop.f32.mrf.mxu0
    %v1484 = vadd.f32 %v1435, %v1483
    %1485 = vmatmul.bf16.gmra.mxu0 %v807
    %v1486 = vpop.f32.mrf.mxu0
    %v1487 = vadd.f32 %v1438, %v1486
    %v1488 = vpop.f32.mrf.mxu0
    %v1489 = vadd.f32 %v1440, %v1488
    %1490 = vmatmul.bf16.gmra.mxu0 %v810
    %v1491 = vpop.f32.mrf.mxu0
    %v1492 = vadd.f32 %v1443, %v1491
    %v1493 = vpop.f32.mrf.mxu0
    %v1494 = vadd.f32 %v1445, %v1493
    %1495 = vmatmul.bf16.gmra.mxu0 %v813
    %v1496 = vpop.f32.mrf.mxu0
    %v1497 = vadd.f32 %v1448, %v1496
    %v1498 = vpop.f32.mrf.mxu0
    %v1499 = vadd.f32 %v1450, %v1498
    %1500 = vdwg.mxu0
    %v1501 = vld [vmem:[%s2] sm:$0x3]
    %v1502 = vld [vmem:[%s3] sm:$0x3]
    %v1503 = vadd.f32 %v1119, %v1121
    %v1504 = vadd.f32 %v1503, %v1124
    %v1505 = vadd.f32 %v1504, %v1126
    %v1506 = vadd.f32 %v1505, %v1129
    %v1507 = vadd.f32 %v1506, %v1131
    %v1508 = vadd.f32 %v1507, %v1134
    %v1509 = vadd.f32 %v1508, %v1136
    %v1510 = vadd.f32 %v1509, %v1139
    %v1511 = vadd.f32 %v1510, %v1141
    %v1512 = vadd.f32 %v1511, %v1144
    %v1513 = vadd.f32 %v1512, %v1146
    %v1514 = vadd.f32 %v1513, %v1149
    %v1515 = vadd.f32 %v1514, %v1151
    %v1516 = vadd.f32 %v1515, %v1154
    %v1517 = vadd.f32 %v1516, %v1156
    %v1518 = vrot.slane %v1517, 4
    %v1519 = vadd.f32 %v1517, %v1518
    %v1520 = vrot.slane %v1519, 2
    %v1521 = vadd.f32 %v1519, %v1520
    %v1522 = vrot.slane %v1521, 1
    %v1523 = vadd.f32 %v1521, %v1522
    %v1524 = vadd.f32 %v1462, %v1464
    %v1525 = vadd.f32 %v1524, %v1467
    %v1526 = vadd.f32 %v1525, %v1469
    %v1527 = vadd.f32 %v1526, %v1472
    %v1528 = vadd.f32 %v1527, %v1474
    %v1529 = vadd.f32 %v1528, %v1477
    %v1530 = vadd.f32 %v1529, %v1479
    %v1531 = vadd.f32 %v1530, %v1482
    %v1532 = vadd.f32 %v1531, %v1484
    %v1533 = vadd.f32 %v1532, %v1487
    %v1534 = vadd.f32 %v1533, %v1489
    %v1535 = vadd.f32 %v1534, %v1492
    %v1536 = vadd.f32 %v1535, %v1494
    %v1537 = vadd.f32 %v1536, %v1497
    %v1538 = vadd.f32 %v1537, %v1499
    %v1539 = vrot.slane %v1538, 4
    %v1540 = vadd.f32 %v1538, %v1539
    %v1541 = vrot.slane %v1540, 2
    %v1542 = vadd.f32 %v1540, %v1541
    %v1543 = vrot.slane %v1542, 1
    %v1544 = vadd.f32 %v1542, %v1543
    %v1545 = vmul.f32 %v1119, %v1119
    %v1546 = vmul.f32 %v1462, %v1462
    %v1547 = vmul.f32 %v1121, %v1121
    %v1548 = vmul.f32 %v1464, %v1464
    %v1549 = vmul.f32 %v1124, %v1124
    %v1550 = vmul.f32 %v1467, %v1467
    %v1551 = vmul.f32 %v1126, %v1126
    %v1552 = vmul.f32 %v1469, %v1469
    %v1553 = vmul.f32 %v1129, %v1129
    %v1554 = vmul.f32 %v1472, %v1472
    %v1555 = vmul.f32 %v1131, %v1131
    %v1556 = vmul.f32 %v1474, %v1474
    %v1557 = vmul.f32 %v1134, %v1134
    %v1558 = vmul.f32 %v1477, %v1477
    %v1559 = vmul.f32 %v1136, %v1136
    %v1560 = vmul.f32 %v1479, %v1479
    %v1561 = vmul.f32 %v1139, %v1139
    %v1562 = vmul.f32 %v1482, %v1482
    %v1563 = vmul.f32 %v1141, %v1141
    %v1564 = vmul.f32 %v1484, %v1484
    %v1565 = vmul.f32 %v1144, %v1144
    %v1566 = vmul.f32 %v1487, %v1487
    %v1567 = vmul.f32 %v1146, %v1146
    %v1568 = vmul.f32 %v1489, %v1489
    %v1569 = vmul.f32 %v1149, %v1149
    %v1570 = vmul.f32 %v1492, %v1492
    %v1571 = vmul.f32 %v1151, %v1151
    %v1572 = vmul.f32 %v1494, %v1494
    %v1573 = vmul.f32 %v1154, %v1154
    %v1574 = vmul.f32 %v1497, %v1497
    %v1575 = vmul.f32 %v1156, %v1156
    %v1576 = vmul.f32 %v1499, %v1499
    %v1577 = vadd.f32 %v1545, %v1547
    %v1578 = vadd.f32 %v1577, %v1549
    %v1579 = vadd.f32 %v1578, %v1551
    %v1580 = vadd.f32 %v1579, %v1553
    %v1581 = vadd.f32 %v1580, %v1555
    %v1582 = vadd.f32 %v1581, %v1557
    %v1583 = vadd.f32 %v1582, %v1559
    %v1584 = vadd.f32 %v1583, %v1561
    %v1585 = vadd.f32 %v1584, %v1563
    %v1586 = vadd.f32 %v1585, %v1565
    %v1587 = vadd.f32 %v1586, %v1567
    %v1588 = vadd.f32 %v1587, %v1569
    %v1589 = vadd.f32 %v1588, %v1571
    %v1590 = vadd.f32 %v1589, %v1573
    %v1591 = vadd.f32 %v1590, %v1575
    %v1592 = vrot.slane %v1591, 4
    %v1593 = vadd.f32 %v1591, %v1592
    %v1594 = vrot.slane %v1593, 2
    %v1595 = vadd.f32 %v1593, %v1594
    %v1596 = vrot.slane %v1595, 1
    %v1597 = vadd.f32 %v1595, %v1596
    %v1598 = vadd.f32 %v1546, %v1548
    %v1599 = vadd.f32 %v1598, %v1550
    %v1600 = vadd.f32 %v1599, %v1552
    %v1601 = vadd.f32 %v1600, %v1554
    %v1602 = vadd.f32 %v1601, %v1556
    %v1603 = vadd.f32 %v1602, %v1558
    %v1604 = vadd.f32 %v1603, %v1560
    %v1605 = vadd.f32 %v1604, %v1562
    %v1606 = vadd.f32 %v1605, %v1564
    %v1607 = vadd.f32 %v1606, %v1566
    %v1608 = vadd.f32 %v1607, %v1568
    %v1609 = vadd.f32 %v1608, %v1570
    %v1610 = vadd.f32 %v1609, %v1572
    %v1611 = vadd.f32 %v1610, %v1574
    %v1612 = vadd.f32 %v1611, %v1576
    %v1613 = vrot.slane %v1612, 4
    %v1614 = vadd.f32 %v1612, %v1613
    %v1615 = vrot.slane %v1614, 2
    %v1616 = vadd.f32 %v1614, %v1615
    %v1617 = vrot.slane %v1616, 1
    %v1618 = vadd.f32 %v1616, %v1617
    %v1619 = vmul.f32 %v1523, 0.0078125
    %v1620 = vmul.f32 %v1544, 0.0078125
    %v1621 = vmul.f32 %v1597, 0.0078125
    %v1622 = vmul.f32 %v1618, 0.0078125
    %v1623 = vmul.f32 %v1619, %v1619
    %v1624 = vmul.f32 %v1620, %v1620
    %v1625 = vsub.f32 %v1621, %v1623
    %v1626 = vsub.f32 %v1622, %v1624
    %v1627 = vmax.f32 %v1625, 0.0
    %v1628 = vmax.f32 %v1626, 0.0
    %v1629 = vadd.f32 %v1627, 1e-05
    %v1630 = vadd.f32 %v1628, 1e-05
    %v1631 = vrsqrt.pop %v1629
    %v1632 = vmul.f32 %v1631, %v1629
    %v1633 = vmul.f32 %v1632, %v1631
    %v1634 = vmul.f32 0.5, %v1633
    %v1635 = vsub.f32 1.5, %v1634
    %v1636 = vmul.f32 %v1631, %v1635
    %vm1637 = vweird.f32 %v1629
    %vm1638 = vweird.f32 %v1631
    %vm1639 = vmor %vm1637, %vm1638
    %v1640 = vsel %vm1639, %v1631, %v1636
    %v1641 = vrsqrt.pop %v1630
    %v1642 = vmul.f32 %v1641, %v1630
    %v1643 = vmul.f32 %v1642, %v1641
    %v1644 = vmul.f32 0.5, %v1643
    %v1645 = vsub.f32 1.5, %v1644
    %v1646 = vmul.f32 %v1641, %v1645
    %vm1647 = vweird.f32 %v1630
    %vm1648 = vweird.f32 %v1641
    %vm1649 = vmor %vm1647, %vm1648
    %v1650 = vsel %vm1649, %v1641, %v1646
    %v1653 = vrot.slane %v1650, 7
    %vm1654 = vcmask 1040384
    %v1655 = vsel %vm1654, %v1640, %v1653
    %v1657 = vmul.f32 %v1501, %v1655
    %v1659 = vperm.slane %v1657, 0
    %v1660 = vperm.slane %v1657, 1
    %v1663 = vmul.f32 %v1619, %v1659
    %v1664 = vmul.f32 %v1620, %v1660
    %v1667 = vrot.slane %v1664, 7
    %v1668 = vsel %vm1654, %v1663, %v1667
    %v1670 = vsub.f32 %v1502, %v1668
    %v1671 = vmul.f32 %v1119, %v1659
    %v1672 = vmul.f32 %v1462, %v1660
    %v1673 = vmul.f32 %v1121, %v1659
    %v1674 = vmul.f32 %v1464, %v1660
    %v1675 = vmul.f32 %v1124, %v1659
    %v1676 = vmul.f32 %v1467, %v1660
    %v1677 = vmul.f32 %v1126, %v1659
    %v1678 = vmul.f32 %v1469, %v1660
    %v1679 = vmul.f32 %v1129, %v1659
    %v1680 = vmul.f32 %v1472, %v1660
    %v1681 = vmul.f32 %v1131, %v1659
    %v1682 = vmul.f32 %v1474, %v1660
    %v1683 = vmul.f32 %v1134, %v1659
    %v1684 = vmul.f32 %v1477, %v1660
    %v1685 = vmul.f32 %v1136, %v1659
    %v1686 = vmul.f32 %v1479, %v1660
    %v1687 = vmul.f32 %v1139, %v1659
    %v1688 = vmul.f32 %v1482, %v1660
    %v1689 = vmul.f32 %v1141, %v1659
    %v1690 = vmul.f32 %v1484, %v1660
    %v1691 = vmul.f32 %v1144, %v1659
    %v1692 = vmul.f32 %v1487, %v1660
    %v1693 = vmul.f32 %v1146, %v1659
    %v1694 = vmul.f32 %v1489, %v1660
    %v1695 = vmul.f32 %v1149, %v1659
    %v1696 = vmul.f32 %v1492, %v1660
    %v1697 = vmul.f32 %v1151, %v1659
    %v1698 = vmul.f32 %v1494, %v1660
    %v1699 = vmul.f32 %v1154, %v1659
    %v1700 = vmul.f32 %v1497, %v1660
    %v1701 = vmul.f32 %v1156, %v1659
    %v1702 = vmul.f32 %v1499, %v1660
    %v1704 = vperm.slane %v1670, 0
    %v1705 = vperm.slane %v1670, 1
    %v1708 = vadd.f32 %v1671, %v1704
    %v1709 = vadd.f32 %v1672, %v1705
    %v1710 = vadd.f32 %v1673, %v1704
    %v1711 = vadd.f32 %v1674, %v1705
    %v1712 = vadd.f32 %v1675, %v1704
    %v1713 = vadd.f32 %v1676, %v1705
    %v1714 = vadd.f32 %v1677, %v1704
    %v1715 = vadd.f32 %v1678, %v1705
    %v1716 = vadd.f32 %v1679, %v1704
    %v1717 = vadd.f32 %v1680, %v1705
    %v1718 = vadd.f32 %v1681, %v1704
    %v1719 = vadd.f32 %v1682, %v1705
    %v1720 = vadd.f32 %v1683, %v1704
    %v1721 = vadd.f32 %v1684, %v1705
    %v1722 = vadd.f32 %v1685, %v1704
    %v1723 = vadd.f32 %v1686, %v1705
    %v1724 = vadd.f32 %v1687, %v1704
    %v1725 = vadd.f32 %v1688, %v1705
    %v1726 = vadd.f32 %v1689, %v1704
    %v1727 = vadd.f32 %v1690, %v1705
    %v1728 = vadd.f32 %v1691, %v1704
    %v1729 = vadd.f32 %v1692, %v1705
    %v1730 = vadd.f32 %v1693, %v1704
    %v1731 = vadd.f32 %v1694, %v1705
    %v1732 = vadd.f32 %v1695, %v1704
    %v1733 = vadd.f32 %v1696, %v1705
    %v1734 = vadd.f32 %v1697, %v1704
    %v1735 = vadd.f32 %v1698, %v1705
    %v1736 = vadd.f32 %v1699, %v1704
    %v1737 = vadd.f32 %v1700, %v1705
    %v1738 = vadd.f32 %v1701, %v1704
    %v1739 = vadd.f32 %v1702, %v1705
    %v1740 = vmax.f32 %v1708, 0.0
    %v1741 = vmax.f32 %v1709, 0.0
    %v1742 = vmax.f32 %v1710, 0.0
    %v1743 = vmax.f32 %v1711, 0.0
    %v1744 = vmax.f32 %v1712, 0.0
    %v1745 = vmax.f32 %v1713, 0.0
    %v1746 = vmax.f32 %v1714, 0.0
    %v1747 = vmax.f32 %v1715, 0.0
    %v1748 = vmax.f32 %v1716, 0.0
    %v1749 = vmax.f32 %v1717, 0.0
    %v1750 = vmax.f32 %v1718, 0.0
    %v1751 = vmax.f32 %v1719, 0.0
    %v1752 = vmax.f32 %v1720, 0.0
    %v1753 = vmax.f32 %v1721, 0.0
    %v1754 = vmax.f32 %v1722, 0.0
    %v1755 = vmax.f32 %v1723, 0.0
    %v1756 = vmax.f32 %v1724, 0.0
    %v1757 = vmax.f32 %v1725, 0.0
    %v1758 = vmax.f32 %v1726, 0.0
    %v1759 = vmax.f32 %v1727, 0.0
    %v1760 = vmax.f32 %v1728, 0.0
    %v1761 = vmax.f32 %v1729, 0.0
    %v1762 = vmax.f32 %v1730, 0.0
    %v1763 = vmax.f32 %v1731, 0.0
    %v1764 = vmax.f32 %v1732, 0.0
    %v1765 = vmax.f32 %v1733, 0.0
    %v1766 = vmax.f32 %v1734, 0.0
    %v1767 = vmax.f32 %v1735, 0.0
    %v1768 = vmax.f32 %v1736, 0.0
    %v1769 = vmax.f32 %v1737, 0.0
    %v1770 = vmax.f32 %v1738, 0.0
    %v1771 = vmax.f32 %v1739, 0.0
    %v1772 = vpack.c.bf16 %v1742, %v1740
    %v1773 = vpack.c.bf16 %v1743, %v1741
    %v1774 = vpack.c.bf16 %v1746, %v1744
    %v1775 = vpack.c.bf16 %v1747, %v1745
    %v1776 = vpack.c.bf16 %v1750, %v1748
    %v1777 = vpack.c.bf16 %v1751, %v1749
    %v1778 = vpack.c.bf16 %v1754, %v1752
    %v1779 = vpack.c.bf16 %v1755, %v1753
    %v1780 = vpack.c.bf16 %v1758, %v1756
    %v1781 = vpack.c.bf16 %v1759, %v1757
    %v1782 = vpack.c.bf16 %v1762, %v1760
    %v1783 = vpack.c.bf16 %v1763, %v1761
    %v1784 = vpack.c.bf16 %v1766, %v1764
    %v1785 = vpack.c.bf16 %v1767, %v1765
    %v1786 = vpack.c.bf16 %v1770, %v1768
    %v1787 = vpack.c.bf16 %v1771, %v1769
    %v1788 = vld [vmem:[%s4] sm:$0xf]
    %v1789 = vld [vmem:[%s4 + $0x4] sm:$0xf]
    %v1790 = vld [vmem:[%s4 + $0x8] sm:$0xf]
    %v1791 = vld [vmem:[%s4 + $0xc] sm:$0xf]
    %v1792 = vld [vmem:[%s4 + $0x10] sm:$0xf]
    %v1793 = vld [vmem:[%s4 + $0x14] sm:$0xf]
    %v1794 = vld [vmem:[%s4 + $0x18] sm:$0xf]
    %v1795 = vld [vmem:[%s4 + $0x1c] sm:$0xf]
    %v1796 = vld [vmem:[%s4 + $0x20] sm:$0xf]
    %v1797 = vld [vmem:[%s4 + $0x24] sm:$0xf]
    %v1798 = vld [vmem:[%s4 + $0x28] sm:$0xf]
    %v1799 = vld [vmem:[%s4 + $0x2c] sm:$0xf]
    %v1800 = vld [vmem:[%s4 + $0x30] sm:$0xf]
    %v1801 = vld [vmem:[%s4 + $0x34] sm:$0xf]
    %v1802 = vld [vmem:[%s4 + $0x38] sm:$0xf]
    %v1803 = vld [vmem:[%s4 + $0x3c] sm:$0xf]
    %v1804 = vld [vmem:[%s4 + $0x40] sm:$0xf]
    %v1805 = vld [vmem:[%s4 + $0x44] sm:$0xf]
    %v1806 = vld [vmem:[%s4 + $0x48] sm:$0xf]
    %v1807 = vld [vmem:[%s4 + $0x4c] sm:$0xf]
    %v1808 = vld [vmem:[%s4 + $0x50] sm:$0xf]
    %v1809 = vld [vmem:[%s4 + $0x54] sm:$0xf]
    %v1810 = vld [vmem:[%s4 + $0x58] sm:$0xf]
    %v1811 = vld [vmem:[%s4 + $0x5c] sm:$0xf]
    %v1812 = vld [vmem:[%s4 + $0x60] sm:$0xf]
    %v1813 = vld [vmem:[%s4 + $0x64] sm:$0xf]
    %v1814 = vld [vmem:[%s4 + $0x68] sm:$0xf]
    %v1815 = vld [vmem:[%s4 + $0x6c] sm:$0xf]
    %v1816 = vld [vmem:[%s4 + $0x70] sm:$0xf]
    %v1817 = vld [vmem:[%s4 + $0x74] sm:$0xf]
    %v1818 = vld [vmem:[%s4 + $0x78] sm:$0xf]
    %v1819 = vld [vmem:[%s4 + $0x7c] sm:$0xf]
    %v1852 = vunpack.c.l.b16 %v1788
    %v1853 = vunpack.c.l.b16 %v1789
    %v1854 = vunpack.c.l.b16 %v1790
    %v1855 = vunpack.c.l.b16 %v1791
    %v1856 = vunpack.c.l.b16 %v1792
    %v1857 = vunpack.c.l.b16 %v1793
    %v1858 = vunpack.c.l.b16 %v1794
    %v1859 = vunpack.c.l.b16 %v1795
    %v1860 = vunpack.c.l.b16 %v1796
    %v1861 = vunpack.c.l.b16 %v1797
    %v1862 = vunpack.c.l.b16 %v1798
    %v1863 = vunpack.c.l.b16 %v1799
    %v1864 = vunpack.c.l.b16 %v1800
    %v1865 = vunpack.c.l.b16 %v1801
    %v1866 = vunpack.c.l.b16 %v1802
    %v1867 = vunpack.c.l.b16 %v1803
    %v1868 = vunpack.c.l.b16 %v1804
    %v1869 = vunpack.c.l.b16 %v1805
    %v1870 = vunpack.c.l.b16 %v1806
    %v1871 = vunpack.c.l.b16 %v1807
    %v1872 = vunpack.c.l.b16 %v1808
    %v1873 = vunpack.c.l.b16 %v1809
    %v1874 = vunpack.c.l.b16 %v1810
    %v1875 = vunpack.c.l.b16 %v1811
    %v1876 = vunpack.c.l.b16 %v1812
    %v1877 = vunpack.c.l.b16 %v1813
    %v1878 = vunpack.c.l.b16 %v1814
    %v1879 = vunpack.c.l.b16 %v1815
    %v1880 = vunpack.c.l.b16 %v1816
    %v1881 = vunpack.c.l.b16 %v1817
    %v1882 = vunpack.c.l.b16 %v1818
    %v1883 = vunpack.c.l.b16 %v1819
    %v1884 = vpack.c.b16 %v1853, %v1852
    %v1885 = vpack.c.b16 %v1855, %v1854
    %v1886 = vpack.c.b16 %v1857, %v1856
    %v1887 = vpack.c.b16 %v1859, %v1858
    %v1888 = vpack.c.b16 %v1861, %v1860
    %v1889 = vpack.c.b16 %v1863, %v1862
    %v1890 = vpack.c.b16 %v1865, %v1864
    %v1891 = vpack.c.b16 %v1867, %v1866
    %v1892 = vpack.c.b16 %v1869, %v1868
    %v1893 = vpack.c.b16 %v1871, %v1870
    %v1894 = vpack.c.b16 %v1873, %v1872
    %v1895 = vpack.c.b16 %v1875, %v1874
    %v1896 = vpack.c.b16 %v1877, %v1876
    %v1897 = vpack.c.b16 %v1879, %v1878
    %v1898 = vpack.c.b16 %v1881, %v1880
    %v1899 = vpack.c.b16 %v1883, %v1882
    %1916 = vmatpush.bf16.msra.mxu0 %v1891
    %1917 = vmatpush.bf16.msra.mxu0 %v1890
    %1918 = vmatpush.bf16.msra.mxu0 %v1889
    %1919 = vmatpush.bf16.msra.mxu0 %v1888
    %1920 = vmatpush.bf16.msra.mxu0 %v1887
    %1921 = vmatpush.bf16.msra.mxu0 %v1886
    %1922 = vmatpush.bf16.msra.mxu0 %v1885
    %1923 = vmatpush.bf16.msra.mxu0 %v1884
    %1924 = vmatmul.bf16.gmra.mxu0 %v1772
    %v1925 = vpop.f32.mrf.mxu0
    %v1926 = vadd.f32 0.0, %v1925
    %v1927 = vpop.f32.mrf.mxu0
    %v1928 = vadd.f32 0.0, %v1927
    %1929 = vmatmul.bf16.gmra.mxu0 %v1774
    %v1930 = vpop.f32.mrf.mxu0
    %v1931 = vadd.f32 0.0, %v1930
    %v1932 = vpop.f32.mrf.mxu0
    %v1933 = vadd.f32 0.0, %v1932
    %1934 = vmatmul.bf16.gmra.mxu0 %v1776
    %v1935 = vpop.f32.mrf.mxu0
    %v1936 = vadd.f32 0.0, %v1935
    %v1937 = vpop.f32.mrf.mxu0
    %v1938 = vadd.f32 0.0, %v1937
    %1939 = vmatmul.bf16.gmra.mxu0 %v1778
    %v1940 = vpop.f32.mrf.mxu0
    %v1941 = vadd.f32 0.0, %v1940
    %v1942 = vpop.f32.mrf.mxu0
    %v1943 = vadd.f32 0.0, %v1942
    %1944 = vmatmul.bf16.gmra.mxu0 %v1780
    %v1945 = vpop.f32.mrf.mxu0
    %v1946 = vadd.f32 0.0, %v1945
    %v1947 = vpop.f32.mrf.mxu0
    %v1948 = vadd.f32 0.0, %v1947
    %1949 = vmatmul.bf16.gmra.mxu0 %v1782
    %v1950 = vpop.f32.mrf.mxu0
    %v1951 = vadd.f32 0.0, %v1950
    %v1952 = vpop.f32.mrf.mxu0
    %v1953 = vadd.f32 0.0, %v1952
    %1954 = vmatmul.bf16.gmra.mxu0 %v1784
    %v1955 = vpop.f32.mrf.mxu0
    %v1956 = vadd.f32 0.0, %v1955
    %v1957 = vpop.f32.mrf.mxu0
    %v1958 = vadd.f32 0.0, %v1957
    %1959 = vmatmul.bf16.gmra.mxu0 %v1786
    %v1960 = vpop.f32.mrf.mxu0
    %v1961 = vadd.f32 0.0, %v1960
    %v1962 = vpop.f32.mrf.mxu0
    %v1963 = vadd.f32 0.0, %v1962
    %1964 = vdwg.mxu0
    %1965 = vmatpush.bf16.msra.mxu0 %v1899
    %1966 = vmatpush.bf16.msra.mxu0 %v1898
    %1967 = vmatpush.bf16.msra.mxu0 %v1897
    %1968 = vmatpush.bf16.msra.mxu0 %v1896
    %1969 = vmatpush.bf16.msra.mxu0 %v1895
    %1970 = vmatpush.bf16.msra.mxu0 %v1894
    %1971 = vmatpush.bf16.msra.mxu0 %v1893
    %1972 = vmatpush.bf16.msra.mxu0 %v1892
    %1973 = vmatmul.bf16.gmra.mxu0 %v1773
    %v1974 = vpop.f32.mrf.mxu0
    %v1975 = vadd.f32 %v1926, %v1974
    %v1976 = vpop.f32.mrf.mxu0
    %v1977 = vadd.f32 %v1928, %v1976
    %1978 = vmatmul.bf16.gmra.mxu0 %v1775
    %v1979 = vpop.f32.mrf.mxu0
    %v1980 = vadd.f32 %v1931, %v1979
    %v1981 = vpop.f32.mrf.mxu0
    %v1982 = vadd.f32 %v1933, %v1981
    %1983 = vmatmul.bf16.gmra.mxu0 %v1777
    %v1984 = vpop.f32.mrf.mxu0
    %v1985 = vadd.f32 %v1936, %v1984
    %v1986 = vpop.f32.mrf.mxu0
    %v1987 = vadd.f32 %v1938, %v1986
    %1988 = vmatmul.bf16.gmra.mxu0 %v1779
    %v1989 = vpop.f32.mrf.mxu0
    %v1990 = vadd.f32 %v1941, %v1989
    %v1991 = vpop.f32.mrf.mxu0
    %v1992 = vadd.f32 %v1943, %v1991
    %1993 = vmatmul.bf16.gmra.mxu0 %v1781
    %v1994 = vpop.f32.mrf.mxu0
    %v1995 = vadd.f32 %v1946, %v1994
    %v1996 = vpop.f32.mrf.mxu0
    %v1997 = vadd.f32 %v1948, %v1996
    %1998 = vmatmul.bf16.gmra.mxu0 %v1783
    %v1999 = vpop.f32.mrf.mxu0
    %v2000 = vadd.f32 %v1951, %v1999
    %v2001 = vpop.f32.mrf.mxu0
    %v2002 = vadd.f32 %v1953, %v2001
    %2003 = vmatmul.bf16.gmra.mxu0 %v1785
    %v2004 = vpop.f32.mrf.mxu0
    %v2005 = vadd.f32 %v1956, %v2004
    %v2006 = vpop.f32.mrf.mxu0
    %v2007 = vadd.f32 %v1958, %v2006
    %2008 = vmatmul.bf16.gmra.mxu0 %v1787
    %v2009 = vpop.f32.mrf.mxu0
    %v2010 = vadd.f32 %v1961, %v2009
    %v2011 = vpop.f32.mrf.mxu0
    %v2012 = vadd.f32 %v1963, %v2011
    %2013 = vdwg.mxu0
    %v2014 = vld [vmem:[%s5] sm:$0x1]
    %v2015 = vld [vmem:[%s6] sm:$0x1]
    %v2016 = vadd.f32 %v1975, %v1977
    %v2017 = vadd.f32 %v2016, %v1980
    %v2018 = vadd.f32 %v2017, %v1982
    %v2019 = vadd.f32 %v2018, %v1985
    %v2020 = vadd.f32 %v2019, %v1987
    %v2021 = vadd.f32 %v2020, %v1990
    %v2022 = vadd.f32 %v2021, %v1992
    %v2023 = vadd.f32 %v2022, %v1995
    %v2024 = vadd.f32 %v2023, %v1997
    %v2025 = vadd.f32 %v2024, %v2000
    %v2026 = vadd.f32 %v2025, %v2002
    %v2027 = vadd.f32 %v2026, %v2005
    %v2028 = vadd.f32 %v2027, %v2007
    %v2029 = vadd.f32 %v2028, %v2010
    %v2030 = vadd.f32 %v2029, %v2012
    %v2031 = vrot.slane %v2030, 4
    %v2032 = vadd.f32 %v2030, %v2031
    %v2033 = vrot.slane %v2032, 2
    %v2034 = vadd.f32 %v2032, %v2033
    %v2035 = vrot.slane %v2034, 1
    %v2036 = vadd.f32 %v2034, %v2035
    %v2037 = vmul.f32 %v1975, %v1975
    %v2038 = vmul.f32 %v1977, %v1977
    %v2039 = vmul.f32 %v1980, %v1980
    %v2040 = vmul.f32 %v1982, %v1982
    %v2041 = vmul.f32 %v1985, %v1985
    %v2042 = vmul.f32 %v1987, %v1987
    %v2043 = vmul.f32 %v1990, %v1990
    %v2044 = vmul.f32 %v1992, %v1992
    %v2045 = vmul.f32 %v1995, %v1995
    %v2046 = vmul.f32 %v1997, %v1997
    %v2047 = vmul.f32 %v2000, %v2000
    %v2048 = vmul.f32 %v2002, %v2002
    %v2049 = vmul.f32 %v2005, %v2005
    %v2050 = vmul.f32 %v2007, %v2007
    %v2051 = vmul.f32 %v2010, %v2010
    %v2052 = vmul.f32 %v2012, %v2012
    %v2053 = vadd.f32 %v2037, %v2038
    %v2054 = vadd.f32 %v2053, %v2039
    %v2055 = vadd.f32 %v2054, %v2040
    %v2056 = vadd.f32 %v2055, %v2041
    %v2057 = vadd.f32 %v2056, %v2042
    %v2058 = vadd.f32 %v2057, %v2043
    %v2059 = vadd.f32 %v2058, %v2044
    %v2060 = vadd.f32 %v2059, %v2045
    %v2061 = vadd.f32 %v2060, %v2046
    %v2062 = vadd.f32 %v2061, %v2047
    %v2063 = vadd.f32 %v2062, %v2048
    %v2064 = vadd.f32 %v2063, %v2049
    %v2065 = vadd.f32 %v2064, %v2050
    %v2066 = vadd.f32 %v2065, %v2051
    %v2067 = vadd.f32 %v2066, %v2052
    %v2068 = vrot.slane %v2067, 4
    %v2069 = vadd.f32 %v2067, %v2068
    %v2070 = vrot.slane %v2069, 2
    %v2071 = vadd.f32 %v2069, %v2070
    %v2072 = vrot.slane %v2071, 1
    %v2073 = vadd.f32 %v2071, %v2072
    %v2074 = vmul.f32 %v2036, 0.0078125
    %v2075 = vmul.f32 %v2073, 0.0078125
    %v2076 = vmul.f32 %v2074, %v2074
    %v2077 = vsub.f32 %v2075, %v2076
    %v2078 = vmax.f32 %v2077, 0.0
    %v2079 = vadd.f32 %v2078, 1e-05
    %v2080 = vrsqrt.pop %v2079
    %v2081 = vmul.f32 %v2080, %v2079
    %v2082 = vmul.f32 %v2081, %v2080
    %v2083 = vmul.f32 0.5, %v2082
    %v2084 = vsub.f32 1.5, %v2083
    %v2085 = vmul.f32 %v2080, %v2084
    %vm2086 = vweird.f32 %v2079
    %vm2087 = vweird.f32 %v2080
    %vm2088 = vmor %vm2086, %vm2087
    %v2089 = vsel %vm2088, %v2080, %v2085
    %v2090 = vmul.f32 %v2014, %v2089
    %v2091 = vmul.f32 %v2074, %v2090
    %v2092 = vsub.f32 %v2015, %v2091
    %v2094 = vperm.slane %v2090, 0
    %v2096 = vmul.f32 %v1975, %v2094
    %v2097 = vmul.f32 %v1977, %v2094
    %v2098 = vmul.f32 %v1980, %v2094
    %v2099 = vmul.f32 %v1982, %v2094
    %v2100 = vmul.f32 %v1985, %v2094
    %v2101 = vmul.f32 %v1987, %v2094
    %v2102 = vmul.f32 %v1990, %v2094
    %v2103 = vmul.f32 %v1992, %v2094
    %v2104 = vmul.f32 %v1995, %v2094
    %v2105 = vmul.f32 %v1997, %v2094
    %v2106 = vmul.f32 %v2000, %v2094
    %v2107 = vmul.f32 %v2002, %v2094
    %v2108 = vmul.f32 %v2005, %v2094
    %v2109 = vmul.f32 %v2007, %v2094
    %v2110 = vmul.f32 %v2010, %v2094
    %v2111 = vmul.f32 %v2012, %v2094
    %v2113 = vperm.slane %v2092, 0
    %v2115 = vadd.f32 %v2096, %v2113
    %v2116 = vadd.f32 %v2097, %v2113
    %v2117 = vadd.f32 %v2098, %v2113
    %v2118 = vadd.f32 %v2099, %v2113
    %v2119 = vadd.f32 %v2100, %v2113
    %v2120 = vadd.f32 %v2101, %v2113
    %v2121 = vadd.f32 %v2102, %v2113
    %v2122 = vadd.f32 %v2103, %v2113
    %v2123 = vadd.f32 %v2104, %v2113
    %v2124 = vadd.f32 %v2105, %v2113
    %v2125 = vadd.f32 %v2106, %v2113
    %v2126 = vadd.f32 %v2107, %v2113
    %v2127 = vadd.f32 %v2108, %v2113
    %v2128 = vadd.f32 %v2109, %v2113
    %v2129 = vadd.f32 %v2110, %v2113
    %v2130 = vadd.f32 %v2111, %v2113
    %v2131 = vmax.f32 %v2115, 0.0
    %v2132 = vmax.f32 %v2116, 0.0
    %v2133 = vmax.f32 %v2117, 0.0
    %v2134 = vmax.f32 %v2118, 0.0
    %v2135 = vmax.f32 %v2119, 0.0
    %v2136 = vmax.f32 %v2120, 0.0
    %v2137 = vmax.f32 %v2121, 0.0
    %v2138 = vmax.f32 %v2122, 0.0
    %v2139 = vmax.f32 %v2123, 0.0
    %v2140 = vmax.f32 %v2124, 0.0
    %v2141 = vmax.f32 %v2125, 0.0
    %v2142 = vmax.f32 %v2126, 0.0
    %v2143 = vmax.f32 %v2127, 0.0
    %v2144 = vmax.f32 %v2128, 0.0
    %v2145 = vmax.f32 %v2129, 0.0
    %v2146 = vmax.f32 %v2130, 0.0
    %v2147 = vpack.c.bf16 %v2132, %v2131
    %v2148 = vpack.c.bf16 %v2134, %v2133
    %v2149 = vpack.c.bf16 %v2136, %v2135
    %v2150 = vpack.c.bf16 %v2138, %v2137
    %v2151 = vpack.c.bf16 %v2140, %v2139
    %v2152 = vpack.c.bf16 %v2142, %v2141
    %v2153 = vpack.c.bf16 %v2144, %v2143
    %v2154 = vpack.c.bf16 %v2146, %v2145
    %v2155 = vld [vmem:[%s7] sm:$0xf]
    %v2156 = vld [vmem:[%s7 + $0x4] sm:$0xf]
    %v2157 = vld [vmem:[%s7 + $0x8] sm:$0xf]
    %v2158 = vld [vmem:[%s7 + $0xc] sm:$0xf]
    %v2159 = vld [vmem:[%s7 + $0x10] sm:$0xf]
    %v2160 = vld [vmem:[%s7 + $0x14] sm:$0xf]
    %v2161 = vld [vmem:[%s7 + $0x18] sm:$0xf]
    %v2162 = vld [vmem:[%s7 + $0x1c] sm:$0xf]
    %v2163 = vld [vmem:[%s7 + $0x20] sm:$0xf]
    %v2164 = vld [vmem:[%s7 + $0x24] sm:$0xf]
    %v2165 = vld [vmem:[%s7 + $0x28] sm:$0xf]
    %v2166 = vld [vmem:[%s7 + $0x2c] sm:$0xf]
    %v2167 = vld [vmem:[%s7 + $0x30] sm:$0xf]
    %v2168 = vld [vmem:[%s7 + $0x34] sm:$0xf]
    %v2169 = vld [vmem:[%s7 + $0x38] sm:$0xf]
    %v2170 = vld [vmem:[%s7 + $0x3c] sm:$0xf]
    %v2171 = vld [vmem:[%s8] sm:$0x1]
    %v2173 = vperm.slane %v2171, 0
    %v2191 = vunpack.c.l.b16 %v2155
    %v2192 = vunpack.c.l.b16 %v2156
    %v2193 = vunpack.c.l.b16 %v2157
    %v2194 = vunpack.c.l.b16 %v2158
    %v2195 = vunpack.c.l.b16 %v2159
    %v2196 = vunpack.c.l.b16 %v2160
    %v2197 = vunpack.c.l.b16 %v2161
    %v2198 = vunpack.c.l.b16 %v2162
    %v2199 = vunpack.c.l.b16 %v2163
    %v2200 = vunpack.c.l.b16 %v2164
    %v2201 = vunpack.c.l.b16 %v2165
    %v2202 = vunpack.c.l.b16 %v2166
    %v2203 = vunpack.c.l.b16 %v2167
    %v2204 = vunpack.c.l.b16 %v2168
    %v2205 = vunpack.c.l.b16 %v2169
    %v2206 = vunpack.c.l.b16 %v2170
    %v2207 = vpack.c.b16 %v2192, %v2191
    %v2208 = vpack.c.b16 %v2194, %v2193
    %v2209 = vpack.c.b16 %v2196, %v2195
    %v2210 = vpack.c.b16 %v2198, %v2197
    %v2211 = vpack.c.b16 %v2200, %v2199
    %v2212 = vpack.c.b16 %v2202, %v2201
    %v2213 = vpack.c.b16 %v2204, %v2203
    %v2214 = vpack.c.b16 %v2206, %v2205
    %2223 = vmatpush.bf16.msra.mxu0 %v2214
    %2224 = vmatpush.bf16.msra.mxu0 %v2213
    %2225 = vmatpush.bf16.msra.mxu0 %v2212
    %2226 = vmatpush.bf16.msra.mxu0 %v2211
    %2227 = vmatpush.bf16.msra.mxu0 %v2210
    %2228 = vmatpush.bf16.msra.mxu0 %v2209
    %2229 = vmatpush.bf16.msra.mxu0 %v2208
    %2230 = vmatpush.bf16.msra.mxu0 %v2207
    %2231 = vmatmul.bf16.gmra.mxu0 %v2147
    %v2232 = vpop.f32.mrf.mxu0
    %v2233 = vadd.f32 %v2173, %v2232
    %v2234 = vpop.f32.mrf.mxu0
    %v2235 = vadd.f32 %v2173, %v2234
    %2236 = vmatmul.bf16.gmra.mxu0 %v2148
    %v2237 = vpop.f32.mrf.mxu0
    %v2238 = vadd.f32 %v2173, %v2237
    %v2239 = vpop.f32.mrf.mxu0
    %v2240 = vadd.f32 %v2173, %v2239
    %2241 = vmatmul.bf16.gmra.mxu0 %v2149
    %v2242 = vpop.f32.mrf.mxu0
    %v2243 = vadd.f32 %v2173, %v2242
    %v2244 = vpop.f32.mrf.mxu0
    %v2245 = vadd.f32 %v2173, %v2244
    %2246 = vmatmul.bf16.gmra.mxu0 %v2150
    %v2247 = vpop.f32.mrf.mxu0
    %v2248 = vadd.f32 %v2173, %v2247
    %v2249 = vpop.f32.mrf.mxu0
    %v2250 = vadd.f32 %v2173, %v2249
    %2251 = vmatmul.bf16.gmra.mxu0 %v2151
    %v2252 = vpop.f32.mrf.mxu0
    %v2253 = vadd.f32 %v2173, %v2252
    %v2254 = vpop.f32.mrf.mxu0
    %v2255 = vadd.f32 %v2173, %v2254
    %2256 = vmatmul.bf16.gmra.mxu0 %v2152
    %v2257 = vpop.f32.mrf.mxu0
    %v2258 = vadd.f32 %v2173, %v2257
    %v2259 = vpop.f32.mrf.mxu0
    %v2260 = vadd.f32 %v2173, %v2259
    %2261 = vmatmul.bf16.gmra.mxu0 %v2153
    %v2262 = vpop.f32.mrf.mxu0
    %v2263 = vadd.f32 %v2173, %v2262
    %v2264 = vpop.f32.mrf.mxu0
    %v2265 = vadd.f32 %v2173, %v2264
    %2266 = vmatmul.bf16.gmra.mxu0 %v2154
    %v2267 = vpop.f32.mrf.mxu0
    %v2268 = vadd.f32 %v2173, %v2267
    %v2269 = vpop.f32.mrf.mxu0
    %v2270 = vadd.f32 %v2173, %v2269
    %2271 = vdwg.mxu0
    %2272 = vst [vmem:[#allocation2] sm:$0xff] %v2233
    %2273 = vst [vmem:[#allocation2 + $0x8] sm:$0xff] %v2235
    %2274 = vst [vmem:[#allocation2 + $0x10] sm:$0xff] %v2238
    %2275 = vst [vmem:[#allocation2 + $0x18] sm:$0xff] %v2240
    %2276 = vst [vmem:[#allocation2 + $0x20] sm:$0xff] %v2243
    %2277 = vst [vmem:[#allocation2 + $0x28] sm:$0xff] %v2245
    %2278 = vst [vmem:[#allocation2 + $0x30] sm:$0xff] %v2248
    %2279 = vst [vmem:[#allocation2 + $0x38] sm:$0xff] %v2250
    %2280 = vst [vmem:[#allocation2 + $0x40] sm:$0xff] %v2253
    %2281 = vst [vmem:[#allocation2 + $0x48] sm:$0xff] %v2255
    %2282 = vst [vmem:[#allocation2 + $0x50] sm:$0xff] %v2258
    %2283 = vst [vmem:[#allocation2 + $0x58] sm:$0xff] %v2260
    %2284 = vst [vmem:[#allocation2 + $0x60] sm:$0xff] %v2263
    %2285 = vst [vmem:[#allocation2 + $0x68] sm:$0xff] %v2265
    %2286 = vst [vmem:[#allocation2 + $0x70] sm:$0xff] %v2268
    %2287 = vst [vmem:[#allocation2 + $0x78] sm:$0xff] %v2270
    // Predicated region
    $region38: #{tpu_custom_call.1} parent=1 // pred_check
      _
    $region39: #{tpu_custom_call.1} parent=1 // pred_check_branch
      %2289 = sbr.rel (0) target = $region41
    $region40: #{tpu_custom_call.1} parent=1 // pred_region
      %2291 = vsyncadd [#allocation3], 0
      %s2292 = sshll.u32 [#allocation2], 4
      %s2293 = int_to_ptr.vmem [resolvable:$true] %s2292
      %s2294 = sshll.u32 %s9, 4
      %s2295 = int_to_ptr.hbm [resolvable:$true] %s2294
      %2300 = dma.vmem_to_hbm [thread:$0]  %s2293, 2048, %s2295, [#allocation3], 128, 128, 8
    $region41: #{tpu_custom_call.1} parent=1 // pred_fallthru
      _
    // Predicated region
    $region42: #{tpu_custom_call.1} parent=1 // pred_check
      _
    $region43: #{tpu_custom_call.1} parent=1 // pred_check_branch
      %2302 = sbr.rel (0) target = $region45
    $region44: #{tpu_custom_call.1} parent=1 // pred_region
      %2304 = dma.done [#allocation3], 2048
    $region45: #{tpu_custom_call.1} parent=1 // pred_fallthru
      _
    %2305 = vsyncpa [#allocation3], 1

</llo_original>
